<compile_context>
chip_gen: v7x
topology: tpu7x:2x2x1
jax: 0.10.0
libtpu: 0.0.40
codegen_flags: <defaults>
</compile_context>

<pallas_src>
import math

import numpy as np
import jax
import jax.numpy as jnp
from jax.experimental import pallas as pl
from jax.experimental.pallas import tpu as pltpu


# ----------------------------- Pallas kernels ------------------------------ #

def make_gcn_score_kernel(tm):
    """GCNConv(+ReLU) + TopKPooling score over one (tm, n_g) diagonal-block row tile.

    Grid: (G, n_g // tm).  Inputs per step:
      a_ref    (tm, n_g)  int8  -> upcast to f32 in-kernel (VPU, free filler)
      y_ref    (n_g, H)   f32   Y = D^{-1/2} (X W), rows of graph g (precomputed outside)
      b_ref    (1, H)     f32   GCNConv bias
      p_ref    (1, H)     f32   normalized TopKPooling projection p / ||p||
      dinv_ref (tm, 1)    f32   D^{-1/2} of this row block
    Outputs: h (tm, H) and a lane-dense score row (1, tm).
    """

    def kernel(a_ref, y_ref, b_ref, p_ref, dinv_ref, h_ref, s_ref):
        i = pl.program_id(1)
        row0 = pl.multiple_of(i * tm, tm)

        # (A + I) @ Y for this row block: int8 -> f32 upcast, f32 MXU dot, explicit
        # self-loop term (A_hat is never materialized; only D^{-1/2} is built outside).
        a = a_ref[...].astype(jnp.float32)
        agg = jnp.dot(a, y_ref[...], preferred_element_type=jnp.float32)
        self_term = y_ref[pl.ds(row0, tm), :]

        h = dinv_ref[...] * (agg + self_term) + b_ref[...]
        h = jnp.maximum(h, 0.0)                              # F.relu in module.forward
        h_ref[...] = h

        # TopKPooling score: tanh(h . p_hat).  VPU mul + XLU lane reduce, then stored
        # lane-dense as a (1, tm) row (no masked (tm, 1) partial stores).
        s_ref[...] = jnp.tanh(jnp.sum(h * p_ref[...], axis=-1))[None, :]

    return kernel


def make_pool_readout_kernel(k):
    """TopKPooling gather + gate and global max / mean readout for one graph.

    Grid: (G,).  perm_ref / gate_ref are scalar-prefetched (SMEM) [G, k] arrays holding
    the per-graph top-k local node ids and their tanh scores.  h_ref is the (n_g, H)
    block of this graph.  The gated rows are written to xnew_ref and then reduced.
    """
    inv_k = 1.0 / float(k)                                   # 1/k baked in (no extra input)

    def kernel(perm_ref, gate_ref, h_ref, gmp_ref, gap_ref, xnew_ref):
        g = pl.program_id(0)

        def body(r, carry):
            idx = perm_ref[g, r]                             # local node id within graph g
            row = h_ref[pl.ds(idx, 1), :] * gate_ref[g, r]   # TopKPooling gating
            xnew_ref[pl.ds(r, 1), :] = row                   # next-layer x, in perm order
            return carry

        jax.lax.fori_loop(0, k, body, 0, unroll=True)

        xg = xnew_ref[...]                                   # (k, H) just written
        gmp_ref[...] = jnp.max(xg, axis=0, keepdims=True)    # global_max_pool
        gap_ref[...] = jnp.sum(xg, axis=0, keepdims=True) * inv_k   # global_mean_pool

    return kernel


# ------------------------------ sizing helpers ------------------------------ #

def _vmem_limit_bytes():
    """Generation-aware VMEM budget: ~96 MiB on v5e/v6e (128 MiB), ~48 MiB on v7x (64 MiB)."""
    cap = 64 * 1024 * 1024
    try:
        cap = int(pltpu.get_tpu_info().vmem_capacity_bytes)
    except Exception:
        pass  # CPU / interpret mode: keep the conservative default
    return min((cap * 3) // 4, 100 * 1024 * 1024)


_VMEM_LIMIT = _vmem_limit_bytes()


def _row_tile(n_g, h_dim, vmem_bytes):
    """Row tile for the per-graph adjacency block: full n_g if it fits, else the largest
    128-multiple divisor (keeps every block (8,128)-legal and the score row lane-dense)."""
    budget = vmem_bytes // 2

    def cost(tm):  # double-buffered int8 A block + f32 h block + per-graph Y block
        return 2 * tm * n_g + 2 * tm * h_dim * 4 + 2 * n_g * h_dim * 4

    if cost(n_g) <= budget:
        return n_g
    tm = (n_g // 128) * 128
    while tm >= 128:
        if n_g % tm == 0 and cost(tm) <= budget:
            return tm
        tm -= 128
    # TODO(synk): graphs too large for a full-width (tm, n_g) row block would need a
    # column-blocked accumulator variant (K-tiled grid axis); not needed at these sizes.
    return n_g


# ------------------------------ Pallas wrappers ----------------------------- #

def gcn_layer(a_blk, y, b_row, p_row, dinv):
    """h = relu(D^{-1/2}(A+I)D^{-1/2} X W + b) and s = tanh(h . p_hat), per-graph blocks."""
    G, n_g, _ = a_blk.shape
    N, H = y.shape
    tm = _row_tile(n_g, H, _VMEM_LIMIT)
    n_blocks = n_g // tm

    h, s3 = pl.pallas_call(
        make_gcn_score_kernel(tm),
        grid=(G, n_blocks),
        in_specs=[
            pl.BlockSpec((None, tm, n_g), lambda g, i: (g, i, 0)),      # int8 A diag block
            pl.BlockSpec((n_g, H), lambda g, i: (g, 0)),                # Y rows of graph g
            pl.BlockSpec((1, H), lambda g, i: (0, 0)),                  # bias row
            pl.BlockSpec((1, H), lambda g, i: (0, 0)),                  # p_hat row
            pl.BlockSpec((tm, 1), lambda g, i: (g * n_blocks + i, 0)),  # D^{-1/2} rows
        ],
        out_specs=[
            pl.BlockSpec((tm, H), lambda g, i: (g * n_blocks + i, 0)),  # h rows
            pl.BlockSpec((None, 1, tm), lambda g, i: (g, 0, i)),        # lane-dense scores
        ],
        out_shape=[
            jax.ShapeDtypeStruct((N, H), jnp.float32),
            jax.ShapeDtypeStruct((G, 1, n_g), jnp.float32),
        ],
        # No cross-step scratch any more -> both axes are independent (megacore on v7x).
        compiler_params=pltpu.CompilerParams(
            dimension_semantics=("parallel", "parallel"),
            vmem_limit_bytes=_VMEM_LIMIT,
        ),
    )(a_blk, y, b_row, p_row, dinv)
    return h, s3.reshape(G, n_g)


def pool_readout(perm, gates, h, num_graphs, n_g, k):
    """TopKPooling gather/gate + gmp/gap readout, one grid step per graph."""
    N, H = h.shape
    gmp3, gap3, xnew3 = pl.pallas_call(
        make_pool_readout_kernel(k),
        grid_spec=pltpu.PrefetchScalarGridSpec(
            num_scalar_prefetch=2,                           # perm, gates -> SMEM
            grid=(num_graphs,),
            in_specs=[
                pl.BlockSpec((n_g, H), lambda g, perm_ref, gate_ref: (g, 0)),
            ],
            out_specs=[
                pl.BlockSpec((None, 1, H), lambda g, perm_ref, gate_ref: (g, 0, 0)),
                pl.BlockSpec((None, 1, H), lambda g, perm_ref, gate_ref: (g, 0, 0)),
                pl.BlockSpec((None, k, H), lambda g, perm_ref, gate_ref: (g, 0, 0)),
            ],
        ),
        out_shape=[
            jax.ShapeDtypeStruct((num_graphs, 1, H), jnp.float32),   # global_max_pool
            jax.ShapeDtypeStruct((num_graphs, 1, H), jnp.float32),   # global_mean_pool
            jax.ShapeDtypeStruct((num_graphs, k, H), jnp.float32),   # gated x (next layer)
        ],
        compiler_params=pltpu.CompilerParams(
            dimension_semantics=("parallel",),
            vmem_limit_bytes=_VMEM_LIMIT,
        ),
    )(perm, gates, h)
    return (gmp3.reshape(num_graphs, H),
            gap3.reshape(num_graphs, H),
            xnew3.reshape(num_graphs * k, H))


# --------------------------------- JAX glue --------------------------------- #

def gcn_pool_block_forward(x, a_blk, params, ratio):
    """Equivalent of GCNPoolBlockLayer.forward for equal-size graphs (compact dense adj)."""
    out = None
    G = a_blk.shape[0]
    for (w, b, p) in params:
        n_g = a_blk.shape[1]
        N = G * n_g

        # GCN normalization: only D^{-1/2} (O(N)) is built; A_hat never exists.
        deg = jnp.sum(a_blk.astype(jnp.float32), axis=2).reshape(N, 1) + 1.0  # + self loop
        dinv = jax.lax.rsqrt(deg)

        # Y = D^{-1/2} (X W) hoisted out of the row-tiled kernel (plain f32 XLA matmul).
        y = dinv * jnp.dot(x, w, preferred_element_type=jnp.float32)
        p_hat = (p / jnp.linalg.norm(p)).reshape(1, -1)

        h, s = gcn_layer(a_blk, y, b.reshape(1, -1), p_hat, dinv)

        # TODO(synk): per-graph top-k node selection is a data-dependent sort; kept in
        # plain JAX (lax.top_k).  Selecting on tanh(score) equals selecting on the raw
        # projection only because tanh is monotonic; the values ARE the gates.
        k = int(math.ceil(ratio * n_g))
        gates, idx = jax.lax.top_k(s, k)                     # (G, k) each, descending
        idx = idx.astype(jnp.int32)

        gmp_out, gap_out, x = pool_readout(idx, gates, h, G, n_g, k)

        # TODO(synk): TopKPooling filter_adj stays as a per-graph JAX gather (O(G*k^2)).
        a_blk = jax.vmap(lambda a, i: a[i][:, i])(a_blk, idx)

        layer_out = jnp.concatenate([gmp_out, gap_out], axis=1)   # [gmp | gap]
        out = layer_out if out is None else out + layer_out
    return out


def build_adjacency_blocks(num_graphs, n):
    """Deterministic ring-with-chords graph per example, compact int8 diagonal blocks."""
    A = np.zeros((num_graphs, n, n), dtype=np.int8)
    for g in range(num_graphs):
        for i in range(n):
            for step in (1, 3):
                j = (i + step) % n
                A[g, i, j] = 1
                A[g, j, i] = 1
    return jnp.asarray(A)


# ----------------------------------- main ----------------------------------- #

if __name__ == "__main__":
    num_graphs, nodes_per_graph = 2, 16     # batch of 2 graphs, 16 nodes each
    F_in, H = 32, 32                        # vector_length = 32, gnn.hidden_size = 32
    ratio = 0.5                             # gnn.pooling_ratio
    layer_num = 2                           # gnn.layer_num (1 input + 1 hidden block)

    N = num_graphs * nodes_per_graph
    key = jax.random.PRNGKey(0)
    x = jax.random.normal(key, (N, F_in), dtype=jnp.float32)
    a_blk = build_adjacency_blocks(num_graphs, nodes_per_graph)

    # deterministic parameter init (GCNConv weight/bias + TopKPooling projection per layer)
    pkey = jax.random.PRNGKey(1)
    params = []
    in_dim = F_in
    for _ in range(layer_num):
        pkey, k1, k2, k3 = jax.random.split(pkey, 4)
        w = jax.random.normal(k1, (in_dim, H), jnp.float32) * 0.1
        b = jax.random.normal(k2, (H,), jnp.float32) * 0.1
        p = jax.random.normal(k3, (H,), jnp.float32)
        params.append((w, b, p))
        in_dim = H

    # jit the whole block to cut per-op dispatch overhead around the two kernels/layer.
    fwd = jax.jit(gcn_pool_block_forward, static_argnames=("ratio",))
    out = fwd(x, a_blk, params, ratio=ratio)
    out = jax.block_until_ready(out)

    assert out.shape == (num_graphs, 2 * H), out.shape
    assert bool(jnp.all(jnp.isfinite(out)))
    print("KERNEL_OK")
</pallas_src>

<mosaic_0001>
module attributes {stable_mosaic.version = 11 : i64} {
  func.func @kernel(%arg0: i32, %arg1: i32, %arg2: memref<1x16x16xi8, #tpu.memory_space<vmem>>, %arg3: memref<16x32xf32, #tpu.memory_space<vmem>>, %arg4: memref<1x32xf32, #tpu.memory_space<vmem>>, %arg5: memref<1x32xf32, #tpu.memory_space<vmem>>, %arg6: memref<16x1xf32, #tpu.memory_space<vmem>>, %arg7: memref<16x32xf32, #tpu.memory_space<vmem>>, %arg8: memref<1x1x16xf32, #tpu.memory_space<vmem>>) attributes {dimension_semantics = [#tpu.dimension_semantics<parallel>, #tpu.dimension_semantics<parallel>], iteration_bounds = array<i64: 2, 1>, scalar_prefetch = 0 : i64, scratch_operands = 0 : i64, tpu.core_type = #tpu.core_type<tc>, window_params = [{transform_indices = @transform_0, window_bounds = array<i64: 1, 16, 16>}, {transform_indices = @transform_1, window_bounds = array<i64: 16, 32>}, {pipeline_mode = #tpu.pipeline_mode<synchronous>, transform_indices = @transform_2, window_bounds = array<i64: 1, 32>}, {pipeline_mode = #tpu.pipeline_mode<synchronous>, transform_indices = @transform_3, window_bounds = array<i64: 1, 32>}, {transform_indices = @transform_4, window_bounds = array<i64: 16, 1>}, {transform_indices = @transform_5, window_bounds = array<i64: 16, 32>}, {transform_indices = @transform_6, window_bounds = array<i64: 1, 1, 16>}]} {
    %c16_i32 = arith.constant 16 : i32
    %0 = arith.muli %arg1, %c16_i32 : i32
    %1 = tpu.assume_multiple %0, 16 : i32
    %c0 = arith.constant 0 : index
    %c0_0 = arith.constant 0 : index
    %c0_1 = arith.constant 0 : index
    %2 = vector.load %arg2[%c0, %c0_0, %c0_1] : memref<1x16x16xi8, #tpu.memory_space<vmem>>, vector<1x16x16xi8>
    %3 = vector.shape_cast %2 : vector<1x16x16xi8> to vector<16x16xi8>
    %4 = arith.sitofp %3 : vector<16x16xi8> to vector<16x16xf32>
    %c0_2 = arith.constant 0 : index
    %c0_3 = arith.constant 0 : index
    %5 = vector.load %arg3[%c0_2, %c0_3] : memref<16x32xf32, #tpu.memory_space<vmem>>, vector<16x32xf32>
    %cst = arith.constant dense<0.000000e+00> : vector<16x32xf32>
    %6 = tpu.matmul %4, %5, %cst {dimension_numbers = #tpu.dot_dimension_numbers<[1], [0], [0], [1], [0, 0, 1, 1], [], []>} : vector<16x16xf32>, vector<16x32xf32>, vector<16x32xf32> -> vector<16x32xf32>
    %7 = arith.index_cast %1 : i32 to index
    %c0_4 = arith.constant 0 : index
    %8 = vector.load %arg3[%7, %c0_4] : memref<16x32xf32, #tpu.memory_space<vmem>>, vector<16x32xf32>
    %c0_5 = arith.constant 0 : index
    %c0_6 = arith.constant 0 : index
    %9 = vector.load %arg6[%c0_5, %c0_6] : memref<16x1xf32, #tpu.memory_space<vmem>>, vector<16x1xf32>
    %10 = arith.addf %6, %8 : vector<16x32xf32>
    %11 = vector.broadcast %9 : vector<16x1xf32> to vector<16x32xf32>
    %12 = arith.mulf %11, %10 : vector<16x32xf32>
    %c0_7 = arith.constant 0 : index
    %c0_8 = arith.constant 0 : index
    %13 = vector.load %arg4[%c0_7, %c0_8] : memref<1x32xf32, #tpu.memory_space<vmem>>, vector<1x32xf32>
    %14 = vector.broadcast %13 : vector<1x32xf32> to vector<16x32xf32>
    %15 = arith.addf %12, %14 : vector<16x32xf32>
    %cst_9 = arith.constant 0.000000e+00 : f32
    %16 = vector.broadcast %cst_9 : f32 to vector<16x32xf32>
    %17 = arith.maximumf %15, %16 : vector<16x32xf32>
    %c0_10 = arith.constant 0 : index
    %c0_11 = arith.constant 0 : index
    %18 = vector.load %arg7[%c0_10, %c0_11] : memref<16x32xf32, #tpu.memory_space<vmem>>, vector<16x32xf32>
    tpu.vector_store %arg7[%c0_10, %c0_11], %17 {strides = array<i32>} : memref<16x32xf32, #tpu.memory_space<vmem>>, vector<16x32xf32>,
    %c0_12 = arith.constant 0 : index
    %c0_13 = arith.constant 0 : index
    %19 = vector.load %arg5[%c0_12, %c0_13] : memref<1x32xf32, #tpu.memory_space<vmem>>, vector<1x32xf32>
    %20 = vector.broadcast %19 : vector<1x32xf32> to vector<16x32xf32>
    %21 = arith.mulf %17, %20 : vector<16x32xf32>
    %cst_14 = arith.constant dense<0.000000e+00> : vector<16xf32>
    %22 = vector.multi_reduction <add>, %21, %cst_14 [1] : vector<16x32xf32> to vector<16xf32>
    %23 = math.tanh %22 : vector<16xf32>
    %24 = vector.shape_cast %23 : vector<16xf32> to vector<1x16xf32>
    %c0_15 = arith.constant 0 : index
    %c0_16 = arith.constant 0 : index
    %c0_17 = arith.constant 0 : index
    %25 = vector.load %arg8[%c0_15, %c0_16, %c0_17] : memref<1x1x16xf32, #tpu.memory_space<vmem>>, vector<1x1x16xf32>
    %26 = vector.shape_cast %25 : vector<1x1x16xf32> to vector<1x16xf32>
    %27 = vector.shape_cast %24 : vector<1x16xf32> to vector<1x1x16xf32>
    tpu.vector_store %arg8[%c0_15, %c0_16, %c0_17], %27 {strides = array<i32>} : memref<1x1x16xf32, #tpu.memory_space<vmem>>, vector<1x1x16xf32>,
    return
  }
  func.func @transform_0(%arg0: i32, %arg1: i32) -> (i32, i32, i32) {
    %c0_i32 = arith.constant 0 : i32
    %c0_i32_0 = arith.constant 0 : i32
    return %arg0, %arg1, %c0_i32 : i32, i32, i32
  }
  func.func @transform_1(%arg0: i32, %arg1: i32) -> (i32, i32) {
    %c0_i32 = arith.constant 0 : i32
    %c0_i32_0 = arith.constant 0 : i32
    return %arg0, %c0_i32 : i32, i32
  }
  func.func @transform_2(%arg0: i32, %arg1: i32) -> (i32, i32) {
    %c0_i32 = arith.constant 0 : i32
    %c0_i32_0 = arith.constant 0 : i32
    %c0_i32_1 = arith.constant 0 : i32
    return %c0_i32, %c0_i32_0 : i32, i32
  }
  func.func @transform_3(%arg0: i32, %arg1: i32) -> (i32, i32) {
    %c0_i32 = arith.constant 0 : i32
    %c0_i32_0 = arith.constant 0 : i32
    %c0_i32_1 = arith.constant 0 : i32
    return %c0_i32, %c0_i32_0 : i32, i32
  }
  func.func @transform_4(%arg0: i32, %arg1: i32) -> (i32, i32) {
    %c1_i32 = arith.constant 1 : i32
    %0 = arith.muli %arg0, %c1_i32 : i32
    %1 = arith.addi %0, %arg1 : i32
    %c0_i32 = arith.constant 0 : i32
    %c0_i32_0 = arith.constant 0 : i32
    return %1, %c0_i32 : i32, i32
  }
  func.func @transform_5(%arg0: i32, %arg1: i32) -> (i32, i32) {
    %c1_i32 = arith.constant 1 : i32
    %0 = arith.muli %arg0, %c1_i32 : i32
    %1 = arith.addi %0, %arg1 : i32
    %c0_i32 = arith.constant 0 : i32
    %c0_i32_0 = arith.constant 0 : i32
    return %1, %c0_i32 : i32, i32
  }
  func.func @transform_6(%arg0: i32, %arg1: i32) -> (i32, i32, i32) {
    %c0_i32 = arith.constant 0 : i32
    %c0_i32_0 = arith.constant 0 : i32
    return %arg0, %c0_i32, %arg1 : i32, i32, i32
  }
}

module attributes {stable_mosaic.version = 11 : i64} {
  func.func @kernel(%arg0: i32, %arg1: memref<2x8xi32, #tpu.memory_space<smem>>, %arg2: memref<2x8xf32, #tpu.memory_space<smem>>, %arg3: memref<16x32xf32, #tpu.memory_space<vmem>>, %arg4: memref<1x1x32xf32, #tpu.memory_space<vmem>>, %arg5: memref<1x1x32xf32, #tpu.memory_space<vmem>>, %arg6: memref<1x8x32xf32, #tpu.memory_space<vmem>>) attributes {dimension_semantics = [#tpu.dimension_semantics<parallel>], iteration_bounds = array<i64: 2>, scalar_prefetch = 2 : i64, scratch_operands = 0 : i64, tpu.core_type = #tpu.core_type<tc>, window_params = [{transform_indices = @transform_0, window_bounds = array<i64: 16, 32>}, {transform_indices = @transform_1, window_bounds = array<i64: 1, 1, 32>}, {transform_indices = @transform_2, window_bounds = array<i64: 1, 1, 32>}, {transform_indices = @transform_3, window_bounds = array<i64: 1, 8, 32>}]} {
    %c0_i32 = arith.constant 0 : i32
    %0 = arith.index_cast %arg0 : i32 to index
    %1 = arith.index_cast %c0_i32 : i32 to index
    %2 = memref.load %arg1[%0, %1] : memref<2x8xi32, #tpu.memory_space<smem>>
    %3 = arith.index_cast %2 : i32 to index
    %c0 = arith.constant 0 : index
    %4 = vector.load %arg3[%3, %c0] : memref<16x32xf32, #tpu.memory_space<vmem>>, vector<1x32xf32>
    %5 = arith.index_cast %arg0 : i32 to index
    %6 = arith.index_cast %c0_i32 : i32 to index
    %7 = memref.load %arg2[%5, %6] : memref<2x8xf32, #tpu.memory_space<smem>>
    %8 = vector.broadcast %7 : f32 to vector<1x32xf32>
    %9 = arith.mulf %4, %8 : vector<1x32xf32>
    %c0_0 = arith.constant 0 : index
    %10 = arith.index_cast %c0_i32 : i32 to index
    %c0_1 = arith.constant 0 : index
    %11 = vector.load %arg6[%c0_0, %10, %c0_1] : memref<1x8x32xf32, #tpu.memory_space<vmem>>, vector<1x1x32xf32>
    %12 = vector.shape_cast %11 : vector<1x1x32xf32> to vector<1x32xf32>
    %13 = vector.shape_cast %9 : vector<1x32xf32> to vector<1x1x32xf32>
    tpu.vector_store %arg6[%c0_0, %10, %c0_1], %13 {strides = array<i32>} : memref<1x8x32xf32, #tpu.memory_space<vmem>>, vector<1x1x32xf32>,
    %c1_i32 = arith.constant 1 : i32
    %14 = arith.index_cast %arg0 : i32 to index
    %15 = arith.index_cast %c1_i32 : i32 to index
    %16 = memref.load %arg1[%14, %15] : memref<2x8xi32, #tpu.memory_space<smem>>
    %17 = arith.index_cast %16 : i32 to index
    %c0_2 = arith.constant 0 : index
    %18 = vector.load %arg3[%17, %c0_2] : memref<16x32xf32, #tpu.memory_space<vmem>>, vector<1x32xf32>
    %19 = arith.index_cast %arg0 : i32 to index
    %20 = arith.index_cast %c1_i32 : i32 to index
    %21 = memref.load %arg2[%19, %20] : memref<2x8xf32, #tpu.memory_space<smem>>
    %22 = vector.broadcast %21 : f32 to vector<1x32xf32>
    %23 = arith.mulf %18, %22 : vector<1x32xf32>
    %c0_3 = arith.constant 0 : index
    %24 = arith.index_cast %c1_i32 : i32 to index
    %c0_4 = arith.constant 0 : index
    %25 = vector.load %arg6[%c0_3, %24, %c0_4] : memref<1x8x32xf32, #tpu.memory_space<vmem>>, vector<1x1x32xf32>
    %26 = vector.shape_cast %25 : vector<1x1x32xf32> to vector<1x32xf32>
    %27 = vector.shape_cast %23 : vector<1x32xf32> to vector<1x1x32xf32>
    tpu.vector_store %arg6[%c0_3, %24, %c0_4], %27 {strides = array<i32>} : memref<1x8x32xf32, #tpu.memory_space<vmem>>, vector<1x1x32xf32>,
    %c2_i32 = arith.constant 2 : i32
    %28 = arith.index_cast %arg0 : i32 to index
    %29 = arith.index_cast %c2_i32 : i32 to index
    %30 = memref.load %arg1[%28, %29] : memref<2x8xi32, #tpu.memory_space<smem>>
    %31 = arith.index_cast %30 : i32 to index
    %c0_5 = arith.constant 0 : index
    %32 = vector.load %arg3[%31, %c0_5] : memref<16x32xf32, #tpu.memory_space<vmem>>, vector<1x32xf32>
    %33 = arith.index_cast %arg0 : i32 to index
    %34 = arith.index_cast %c2_i32 : i32 to index
    %35 = memref.load %arg2[%33, %34] : memref<2x8xf32, #tpu.memory_space<smem>>
    %36 = vector.broadcast %35 : f32 to vector<1x32xf32>
    %37 = arith.mulf %32, %36 : vector<1x32xf32>
    %c0_6 = arith.constant 0 : index
    %38 = arith.index_cast %c2_i32 : i32 to index
    %c0_7 = arith.constant 0 : index
    %39 = vector.load %arg6[%c0_6, %38, %c0_7] : memref<1x8x32xf32, #tpu.memory_space<vmem>>, vector<1x1x32xf32>
    %40 = vector.shape_cast %39 : vector<1x1x32xf32> to vector<1x32xf32>
    %41 = vector.shape_cast %37 : vector<1x32xf32> to vector<1x1x32xf32>
    tpu.vector_store %arg6[%c0_6, %38, %c0_7], %41 {strides = array<i32>} : memref<1x8x32xf32, #tpu.memory_space<vmem>>, vector<1x1x32xf32>,
    %c3_i32 = arith.constant 3 : i32
    %42 = arith.index_cast %arg0 : i32 to index
    %43 = arith.index_cast %c3_i32 : i32 to index
    %44 = memref.load %arg1[%42, %43] : memref<2x8xi32, #tpu.memory_space<smem>>
    %45 = arith.index_cast %44 : i32 to index
    %c0_8 = arith.constant 0 : index
    %46 = vector.load %arg3[%45, %c0_8] : memref<16x32xf32, #tpu.memory_space<vmem>>, vector<1x32xf32>
    %47 = arith.index_cast %arg0 : i32 to index
    %48 = arith.index_cast %c3_i32 : i32 to index
    %49 = memref.load %arg2[%47, %48] : memref<2x8xf32, #tpu.memory_space<smem>>
    %50 = vector.broadcast %49 : f32 to vector<1x32xf32>
    %51 = arith.mulf %46, %50 : vector<1x32xf32>
    %c0_9 = arith.constant 0 : index
    %52 = arith.index_cast %c3_i32 : i32 to index
    %c0_10 = arith.constant 0 : index
    %53 = vector.load %arg6[%c0_9, %52, %c0_10] : memref<1x8x32xf32, #tpu.memory_space<vmem>>, vector<1x1x32xf32>
    %54 = vector.shape_cast %53 : vector<1x1x32xf32> to vector<1x32xf32>
    %55 = vector.shape_cast %51 : vector<1x32xf32> to vector<1x1x32xf32>
    tpu.vector_store %arg6[%c0_9, %52, %c0_10], %55 {strides = array<i32>} : memref<1x8x32xf32, #tpu.memory_space<vmem>>, vector<1x1x32xf32>,
    %c4_i32 = arith.constant 4 : i32
    %56 = arith.index_cast %arg0 : i32 to index
    %57 = arith.index_cast %c4_i32 : i32 to index
    %58 = memref.load %arg1[%56, %57] : memref<2x8xi32, #tpu.memory_space<smem>>
    %59 = arith.index_cast %58 : i32 to index
    %c0_11 = arith.constant 0 : index
    %60 = vector.load %arg3[%59, %c0_11] : memref<16x32xf32, #tpu.memory_space<vmem>>, vector<1x32xf32>
    %61 = arith.index_cast %arg0 : i32 to index
    %62 = arith.index_cast %c4_i32 : i32 to index
    %63 = memref.load %arg2[%61, %62] : memref<2x8xf32, #tpu.memory_space<smem>>
    %64 = vector.broadcast %63 : f32 to vector<1x32xf32>
    %65 = arith.mulf %60, %64 : vector<1x32xf32>
    %c0_12 = arith.constant 0 : index
    %66 = arith.index_cast %c4_i32 : i32 to index
    %c0_13 = arith.constant 0 : index
    %67 = vector.load %arg6[%c0_12, %66, %c0_13] : memref<1x8x32xf32, #tpu.memory_space<vmem>>, vector<1x1x32xf32>
    %68 = vector.shape_cast %67 : vector<1x1x32xf32> to vector<1x32xf32>
    %69 = vector.shape_cast %65 : vector<1x32xf32> to vector<1x1x32xf32>
    tpu.vector_store %arg6[%c0_12, %66, %c0_13], %69 {strides = array<i32>} : memref<1x8x32xf32, #tpu.memory_space<vmem>>, vector<1x1x32xf32>,
    %c5_i32 = arith.constant 5 : i32
    %70 = arith.index_cast %arg0 : i32 to index
    %71 = arith.index_cast %c5_i32 : i32 to index
    %72 = memref.load %arg1[%70, %71] : memref<2x8xi32, #tpu.memory_space<smem>>
    %73 = arith.index_cast %72 : i32 to index
    %c0_14 = arith.constant 0 : index
    %74 = vector.load %arg3[%73, %c0_14] : memref<16x32xf32, #tpu.memory_space<vmem>>, vector<1x32xf32>
    %75 = arith.index_cast %arg0 : i32 to index
    %76 = arith.index_cast %c5_i32 : i32 to index
    %77 = memref.load %arg2[%75, %76] : memref<2x8xf32, #tpu.memory_space<smem>>
    %78 = vector.broadcast %77 : f32 to vector<1x32xf32>
    %79 = arith.mulf %74, %78 : vector<1x32xf32>
    %c0_15 = arith.constant 0 : index
    %80 = arith.index_cast %c5_i32 : i32 to index
    %c0_16 = arith.constant 0 : index
    %81 = vector.load %arg6[%c0_15, %80, %c0_16] : memref<1x8x32xf32, #tpu.memory_space<vmem>>, vector<1x1x32xf32>
    %82 = vector.shape_cast %81 : vector<1x1x32xf32> to vector<1x32xf32>
    %83 = vector.shape_cast %79 : vector<1x32xf32> to vector<1x1x32xf32>
    tpu.vector_store %arg6[%c0_15, %80, %c0_16], %83 {strides = array<i32>} : memref<1x8x32xf32, #tpu.memory_space<vmem>>, vector<1x1x32xf32>,
    %c6_i32 = arith.constant 6 : i32
    %84 = arith.index_cast %arg0 : i32 to index
    %85 = arith.index_cast %c6_i32 : i32 to index
    %86 = memref.load %arg1[%84, %85] : memref<2x8xi32, #tpu.memory_space<smem>>
    %87 = arith.index_cast %86 : i32 to index
    %c0_17 = arith.constant 0 : index
    %88 = vector.load %arg3[%87, %c0_17] : memref<16x32xf32, #tpu.memory_space<vmem>>, vector<1x32xf32>
    %89 = arith.index_cast %arg0 : i32 to index
    %90 = arith.index_cast %c6_i32 : i32 to index
    %91 = memref.load %arg2[%89, %90] : memref<2x8xf32, #tpu.memory_space<smem>>
    %92 = vector.broadcast %91 : f32 to vector<1x32xf32>
    %93 = arith.mulf %88, %92 : vector<1x32xf32>
    %c0_18 = arith.constant 0 : index
    %94 = arith.index_cast %c6_i32 : i32 to index
    %c0_19 = arith.constant 0 : index
    %95 = vector.load %arg6[%c0_18, %94, %c0_19] : memref<1x8x32xf32, #tpu.memory_space<vmem>>, vector<1x1x32xf32>
    %96 = vector.shape_cast %95 : vector<1x1x32xf32> to vector<1x32xf32>
    %97 = vector.shape_cast %93 : vector<1x32xf32> to vector<1x1x32xf32>
    tpu.vector_store %arg6[%c0_18, %94, %c0_19], %97 {strides = array<i32>} : memref<1x8x32xf32, #tpu.memory_space<vmem>>, vector<1x1x32xf32>,
    %c7_i32 = arith.constant 7 : i32
    %98 = arith.index_cast %arg0 : i32 to index
    %99 = arith.index_cast %c7_i32 : i32 to index
    %100 = memref.load %arg1[%98, %99] : memref<2x8xi32, #tpu.memory_space<smem>>
    %101 = arith.index_cast %100 : i32 to index
    %c0_20 = arith.constant 0 : index
    %102 = vector.load %arg3[%101, %c0_20] : memref<16x32xf32, #tpu.memory_space<vmem>>, vector<1x32xf32>
    %103 = arith.index_cast %arg0 : i32 to index
    %104 = arith.index_cast %c7_i32 : i32 to index
    %105 = memref.load %arg2[%103, %104] : memref<2x8xf32, #tpu.memory_space<smem>>
    %106 = vector.broadcast %105 : f32 to vector<1x32xf32>
    %107 = arith.mulf %102, %106 : vector<1x32xf32>
    %c0_21 = arith.constant 0 : index
    %108 = arith.index_cast %c7_i32 : i32 to index
    %c0_22 = arith.constant 0 : index
    %109 = vector.load %arg6[%c0_21, %108, %c0_22] : memref<1x8x32xf32, #tpu.memory_space<vmem>>, vector<1x1x32xf32>
    %110 = vector.shape_cast %109 : vector<1x1x32xf32> to vector<1x32xf32>
    %111 = vector.shape_cast %107 : vector<1x32xf32> to vector<1x1x32xf32>
    tpu.vector_store %arg6[%c0_21, %108, %c0_22], %111 {strides = array<i32>} : memref<1x8x32xf32, #tpu.memory_space<vmem>>, vector<1x1x32xf32>,
    %c8_i32 = arith.constant 8 : i32
    %c0_23 = arith.constant 0 : index
    %c0_24 = arith.constant 0 : index
    %c0_25 = arith.constant 0 : index
    %112 = vector.load %arg6[%c0_23, %c0_24, %c0_25] : memref<1x8x32xf32, #tpu.memory_space<vmem>>, vector<1x8x32xf32>
    %113 = vector.shape_cast %112 : vector<1x8x32xf32> to vector<8x32xf32>
    %cst = arith.constant dense<0xFF800000> : vector<32xf32>
    %114 = vector.multi_reduction <maximumf>, %113, %cst [0] : vector<8x32xf32> to vector<32xf32>
    %115 = vector.shape_cast %114 : vector<32xf32> to vector<1x32xf32>
    %c0_26 = arith.constant 0 : index
    %c0_27 = arith.constant 0 : index
    %c0_28 = arith.constant 0 : index
    %116 = vector.load %arg4[%c0_26, %c0_27, %c0_28] : memref<1x1x32xf32, #tpu.memory_space<vmem>>, vector<1x1x32xf32>
    %117 = vector.shape_cast %116 : vector<1x1x32xf32> to vector<1x32xf32>
    %118 = vector.shape_cast %115 : vector<1x32xf32> to vector<1x1x32xf32>
    tpu.vector_store %arg4[%c0_26, %c0_27, %c0_28], %118 {strides = array<i32>} : memref<1x1x32xf32, #tpu.memory_space<vmem>>, vector<1x1x32xf32>,
    %cst_29 = arith.constant dense<0.000000e+00> : vector<32xf32>
    %119 = vector.multi_reduction <add>, %113, %cst_29 [0] : vector<8x32xf32> to vector<32xf32>
    %120 = vector.shape_cast %119 : vector<32xf32> to vector<1x32xf32>
    %cst_30 = arith.constant 1.250000e-01 : f32
    %121 = vector.broadcast %cst_30 : f32 to vector<1x32xf32>
    %122 = arith.mulf %120, %121 : vector<1x32xf32>
    %c0_31 = arith.constant 0 : index
    %c0_32 = arith.constant 0 : index
    %c0_33 = arith.constant 0 : index
    %123 = vector.load %arg5[%c0_31, %c0_32, %c0_33] : memref<1x1x32xf32, #tpu.memory_space<vmem>>, vector<1x1x32xf32>
    %124 = vector.shape_cast %123 : vector<1x1x32xf32> to vector<1x32xf32>
    %125 = vector.shape_cast %122 : vector<1x32xf32> to vector<1x1x32xf32>
    tpu.vector_store %arg5[%c0_31, %c0_32, %c0_33], %125 {strides = array<i32>} : memref<1x1x32xf32, #tpu.memory_space<vmem>>, vector<1x1x32xf32>,
    return
  }
  func.func @transform_0(%arg0: i32, %arg1: memref<2x8xi32, #tpu.memory_space<smem>>, %arg2: memref<2x8xf32, #tpu.memory_space<smem>>) -> (i32, i32) {
    %c0_i32 = arith.constant 0 : i32
    %c0_i32_0 = arith.constant 0 : i32
    return %arg0, %c0_i32 : i32, i32
  }
  func.func @transform_1(%arg0: i32, %arg1: memref<2x8xi32, #tpu.memory_space<smem>>, %arg2: memref<2x8xf32, #tpu.memory_space<smem>>) -> (i32, i32, i32) {
    %c0_i32 = arith.constant 0 : i32
    %c0_i32_0 = arith.constant 0 : i32
    %c0_i32_1 = arith.constant 0 : i32
    return %arg0, %c0_i32, %c0_i32_0 : i32, i32, i32
  }
  func.func @transform_2(%arg0: i32, %arg1: memref<2x8xi32, #tpu.memory_space<smem>>, %arg2: memref<2x8xf32, #tpu.memory_space<smem>>) -> (i32, i32, i32) {
    %c0_i32 = arith.constant 0 : i32
    %c0_i32_0 = arith.constant 0 : i32
    %c0_i32_1 = arith.constant 0 : i32
    return %arg0, %c0_i32, %c0_i32_0 : i32, i32, i32
  }
  func.func @transform_3(%arg0: i32, %arg1: memref<2x8xi32, #tpu.memory_space<smem>>, %arg2: memref<2x8xf32, #tpu.memory_space<smem>>) -> (i32, i32, i32) {
    %c0_i32 = arith.constant 0 : i32
    %c0_i32_0 = arith.constant 0 : i32
    %c0_i32_1 = arith.constant 0 : i32
    return %arg0, %c0_i32, %c0_i32_0 : i32, i32, i32
  }
}

module attributes {stable_mosaic.version = 11 : i64} {
  func.func @kernel(%arg0: i32, %arg1: i32, %arg2: memref<1x8x8xi8, #tpu.memory_space<vmem>>, %arg3: memref<8x32xf32, #tpu.memory_space<vmem>>, %arg4: memref<1x32xf32, #tpu.memory_space<vmem>>, %arg5: memref<1x32xf32, #tpu.memory_space<vmem>>, %arg6: memref<8x1xf32, #tpu.memory_space<vmem>>, %arg7: memref<8x32xf32, #tpu.memory_space<vmem>>, %arg8: memref<1x1x8xf32, #tpu.memory_space<vmem>>) attributes {dimension_semantics = [#tpu.dimension_semantics<parallel>, #tpu.dimension_semantics<parallel>], iteration_bounds = array<i64: 2, 1>, scalar_prefetch = 0 : i64, scratch_operands = 0 : i64, tpu.core_type = #tpu.core_type<tc>, window_params = [{transform_indices = @transform_0, window_bounds = array<i64: 1, 8, 8>}, {transform_indices = @transform_1, window_bounds = array<i64: 8, 32>}, {pipeline_mode = #tpu.pipeline_mode<synchronous>, transform_indices = @transform_2, window_bounds = array<i64: 1, 32>}, {pipeline_mode = #tpu.pipeline_mode<synchronous>, transform_indices = @transform_3, window_bounds = array<i64: 1, 32>}, {transform_indices = @transform_4, window_bounds = array<i64: 8, 1>}, {transform_indices = @transform_5, window_bounds = array<i64: 8, 32>}, {transform_indices = @transform_6, window_bounds = array<i64: 1, 1, 8>}]} {
    %c8_i32 = arith.constant 8 : i32
    %0 = arith.muli %arg1, %c8_i32 : i32
    %1 = tpu.assume_multiple %0, 8 : i32
    %c0 = arith.constant 0 : index
    %c0_0 = arith.constant 0 : index
    %c0_1 = arith.constant 0 : index
    %2 = vector.load %arg2[%c0, %c0_0, %c0_1] : memref<1x8x8xi8, #tpu.memory_space<vmem>>, vector<1x8x8xi8>
    %3 = vector.shape_cast %2 : vector<1x8x8xi8> to vector<8x8xi8>
    %4 = arith.sitofp %3 : vector<8x8xi8> to vector<8x8xf32>
    %c0_2 = arith.constant 0 : index
    %c0_3 = arith.constant 0 : index
    %5 = vector.load %arg3[%c0_2, %c0_3] : memref<8x32xf32, #tpu.memory_space<vmem>>, vector<8x32xf32>
    %cst = arith.constant dense<0.000000e+00> : vector<8x32xf32>
    %6 = tpu.matmul %4, %5, %cst {dimension_numbers = #tpu.dot_dimension_numbers<[1], [0], [0], [1], [0, 0, 1, 1], [], []>} : vector<8x8xf32>, vector<8x32xf32>, vector<8x32xf32> -> vector<8x32xf32>
    %7 = arith.index_cast %1 : i32 to index
    %c0_4 = arith.constant 0 : index
    %8 = vector.load %arg3[%7, %c0_4] : memref<8x32xf32, #tpu.memory_space<vmem>>, vector<8x32xf32>
    %c0_5 = arith.constant 0 : index
    %c0_6 = arith.constant 0 : index
    %9 = vector.load %arg6[%c0_5, %c0_6] : memref<8x1xf32, #tpu.memory_space<vmem>>, vector<8x1xf32>
    %10 = arith.addf %6, %8 : vector<8x32xf32>
    %11 = vector.broadcast %9 : vector<8x1xf32> to vector<8x32xf32>
    %12 = arith.mulf %11, %10 : vector<8x32xf32>
    %c0_7 = arith.constant 0 : index
    %c0_8 = arith.constant 0 : index
    %13 = vector.load %arg4[%c0_7, %c0_8] : memref<1x32xf32, #tpu.memory_space<vmem>>, vector<1x32xf32>
    %14 = vector.broadcast %13 : vector<1x32xf32> to vector<8x32xf32>
    %15 = arith.addf %12, %14 : vector<8x32xf32>
    %cst_9 = arith.constant 0.000000e+00 : f32
    %16 = vector.broadcast %cst_9 : f32 to vector<8x32xf32>
    %17 = arith.maximumf %15, %16 : vector<8x32xf32>
    %c0_10 = arith.constant 0 : index
    %c0_11 = arith.constant 0 : index
    %18 = vector.load %arg7[%c0_10, %c0_11] : memref<8x32xf32, #tpu.memory_space<vmem>>, vector<8x32xf32>
    tpu.vector_store %arg7[%c0_10, %c0_11], %17 {strides = array<i32>} : memref<8x32xf32, #tpu.memory_space<vmem>>, vector<8x32xf32>,
    %c0_12 = arith.constant 0 : index
    %c0_13 = arith.constant 0 : index
    %19 = vector.load %arg5[%c0_12, %c0_13] : memref<1x32xf32, #tpu.memory_space<vmem>>, vector<1x32xf32>
    %20 = vector.broadcast %19 : vector<1x32xf32> to vector<8x32xf32>
    %21 = arith.mulf %17, %20 : vector<8x32xf32>
    %cst_14 = arith.constant dense<0.000000e+00> : vector<8xf32>
    %22 = vector.multi_reduction <add>, %21, %cst_14 [1] : vector<8x32xf32> to vector<8xf32>
    %23 = math.tanh %22 : vector<8xf32>
    %24 = vector.shape_cast %23 : vector<8xf32> to vector<1x8xf32>
    %c0_15 = arith.constant 0 : index
    %c0_16 = arith.constant 0 : index
    %c0_17 = arith.constant 0 : index
    %25 = vector.load %arg8[%c0_15, %c0_16, %c0_17] : memref<1x1x8xf32, #tpu.memory_space<vmem>>, vector<1x1x8xf32>
    %26 = vector.shape_cast %25 : vector<1x1x8xf32> to vector<1x8xf32>
    %27 = vector.shape_cast %24 : vector<1x8xf32> to vector<1x1x8xf32>
    tpu.vector_store %arg8[%c0_15, %c0_16, %c0_17], %27 {strides = array<i32>} : memref<1x1x8xf32, #tpu.memory_space<vmem>>, vector<1x1x8xf32>,
    return
  }
  func.func @transform_0(%arg0: i32, %arg1: i32) -> (i32, i32, i32) {
    %c0_i32 = arith.constant 0 : i32
    %c0_i32_0 = arith.constant 0 : i32
    return %arg0, %arg1, %c0_i32 : i32, i32, i32
  }
  func.func @transform_1(%arg0: i32, %arg1: i32) -> (i32, i32) {
    %c0_i32 = arith.constant 0 : i32
    %c0_i32_0 = arith.constant 0 : i32
    return %arg0, %c0_i32 : i32, i32
  }
  func.func @transform_2(%arg0: i32, %arg1: i32) -> (i32, i32) {
    %c0_i32 = arith.constant 0 : i32
    %c0_i32_0 = arith.constant 0 : i32
    %c0_i32_1 = arith.constant 0 : i32
    return %c0_i32, %c0_i32_0 : i32, i32
  }
  func.func @transform_3(%arg0: i32, %arg1: i32) -> (i32, i32) {
    %c0_i32 = arith.constant 0 : i32
    %c0_i32_0 = arith.constant 0 : i32
    %c0_i32_1 = arith.constant 0 : i32
    return %c0_i32, %c0_i32_0 : i32, i32
  }
  func.func @transform_4(%arg0: i32, %arg1: i32) -> (i32, i32) {
    %c1_i32 = arith.constant 1 : i32
    %0 = arith.muli %arg0, %c1_i32 : i32
    %1 = arith.addi %0, %arg1 : i32
    %c0_i32 = arith.constant 0 : i32
    %c0_i32_0 = arith.constant 0 : i32
    return %1, %c0_i32 : i32, i32
  }
  func.func @transform_5(%arg0: i32, %arg1: i32) -> (i32, i32) {
    %c1_i32 = arith.constant 1 : i32
    %0 = arith.muli %arg0, %c1_i32 : i32
    %1 = arith.addi %0, %arg1 : i32
    %c0_i32 = arith.constant 0 : i32
    %c0_i32_0 = arith.constant 0 : i32
    return %1, %c0_i32 : i32, i32
  }
  func.func @transform_6(%arg0: i32, %arg1: i32) -> (i32, i32, i32) {
    %c0_i32 = arith.constant 0 : i32
    %c0_i32_0 = arith.constant 0 : i32
    return %arg0, %c0_i32, %arg1 : i32, i32, i32
  }
}

module attributes {stable_mosaic.version = 11 : i64} {
  func.func @kernel(%arg0: i32, %arg1: memref<2x4xi32, #tpu.memory_space<smem>>, %arg2: memref<2x4xf32, #tpu.memory_space<smem>>, %arg3: memref<8x32xf32, #tpu.memory_space<vmem>>, %arg4: memref<1x1x32xf32, #tpu.memory_space<vmem>>, %arg5: memref<1x1x32xf32, #tpu.memory_space<vmem>>, %arg6: memref<1x4x32xf32, #tpu.memory_space<vmem>>) attributes {dimension_semantics = [#tpu.dimension_semantics<parallel>], iteration_bounds = array<i64: 2>, scalar_prefetch = 2 : i64, scratch_operands = 0 : i64, tpu.core_type = #tpu.core_type<tc>, window_params = [{transform_indices = @transform_0, window_bounds = array<i64: 8, 32>}, {transform_indices = @transform_1, window_bounds = array<i64: 1, 1, 32>}, {transform_indices = @transform_2, window_bounds = array<i64: 1, 1, 32>}, {transform_indices = @transform_3, window_bounds = array<i64: 1, 4, 32>}]} {
    %c0_i32 = arith.constant 0 : i32
    %0 = arith.index_cast %arg0 : i32 to index
    %1 = arith.index_cast %c0_i32 : i32 to index
    %2 = memref.load %arg1[%0, %1] : memref<2x4xi32, #tpu.memory_space<smem>>
    %3 = arith.index_cast %2 : i32 to index
    %c0 = arith.constant 0 : index
    %4 = vector.load %arg3[%3, %c0] : memref<8x32xf32, #tpu.memory_space<vmem>>, vector<1x32xf32>
    %5 = arith.index_cast %arg0 : i32 to index
    %6 = arith.index_cast %c0_i32 : i32 to index
    %7 = memref.load %arg2[%5, %6] : memref<2x4xf32, #tpu.memory_space<smem>>
    %8 = vector.broadcast %7 : f32 to vector<1x32xf32>
    %9 = arith.mulf %4, %8 : vector<1x32xf32>
    %c0_0 = arith.constant 0 : index
    %10 = arith.index_cast %c0_i32 : i32 to index
    %c0_1 = arith.constant 0 : index
    %11 = vector.load %arg6[%c0_0, %10, %c0_1] : memref<1x4x32xf32, #tpu.memory_space<vmem>>, vector<1x1x32xf32>
    %12 = vector.shape_cast %11 : vector<1x1x32xf32> to vector<1x32xf32>
    %13 = vector.shape_cast %9 : vector<1x32xf32> to vector<1x1x32xf32>
    tpu.vector_store %arg6[%c0_0, %10, %c0_1], %13 {strides = array<i32>} : memref<1x4x32xf32, #tpu.memory_space<vmem>>, vector<1x1x32xf32>,
    %c1_i32 = arith.constant 1 : i32
    %14 = arith.index_cast %arg0 : i32 to index
    %15 = arith.index_cast %c1_i32 : i32 to index
    %16 = memref.load %arg1[%14, %15] : memref<2x4xi32, #tpu.memory_space<smem>>
    %17 = arith.index_cast %16 : i32 to index
    %c0_2 = arith.constant 0 : index
    %18 = vector.load %arg3[%17, %c0_2] : memref<8x32xf32, #tpu.memory_space<vmem>>, vector<1x32xf32>
    %19 = arith.index_cast %arg0 : i32 to index
    %20 = arith.index_cast %c1_i32 : i32 to index
    %21 = memref.load %arg2[%19, %20] : memref<2x4xf32, #tpu.memory_space<smem>>
    %22 = vector.broadcast %21 : f32 to vector<1x32xf32>
    %23 = arith.mulf %18, %22 : vector<1x32xf32>
    %c0_3 = arith.constant 0 : index
    %24 = arith.index_cast %c1_i32 : i32 to index
    %c0_4 = arith.constant 0 : index
    %25 = vector.load %arg6[%c0_3, %24, %c0_4] : memref<1x4x32xf32, #tpu.memory_space<vmem>>, vector<1x1x32xf32>
    %26 = vector.shape_cast %25 : vector<1x1x32xf32> to vector<1x32xf32>
    %27 = vector.shape_cast %23 : vector<1x32xf32> to vector<1x1x32xf32>
    tpu.vector_store %arg6[%c0_3, %24, %c0_4], %27 {strides = array<i32>} : memref<1x4x32xf32, #tpu.memory_space<vmem>>, vector<1x1x32xf32>,
    %c2_i32 = arith.constant 2 : i32
    %28 = arith.index_cast %arg0 : i32 to index
    %29 = arith.index_cast %c2_i32 : i32 to index
    %30 = memref.load %arg1[%28, %29] : memref<2x4xi32, #tpu.memory_space<smem>>
    %31 = arith.index_cast %30 : i32 to index
    %c0_5 = arith.constant 0 : index
    %32 = vector.load %arg3[%31, %c0_5] : memref<8x32xf32, #tpu.memory_space<vmem>>, vector<1x32xf32>
    %33 = arith.index_cast %arg0 : i32 to index
    %34 = arith.index_cast %c2_i32 : i32 to index
    %35 = memref.load %arg2[%33, %34] : memref<2x4xf32, #tpu.memory_space<smem>>
    %36 = vector.broadcast %35 : f32 to vector<1x32xf32>
    %37 = arith.mulf %32, %36 : vector<1x32xf32>
    %c0_6 = arith.constant 0 : index
    %38 = arith.index_cast %c2_i32 : i32 to index
    %c0_7 = arith.constant 0 : index
    %39 = vector.load %arg6[%c0_6, %38, %c0_7] : memref<1x4x32xf32, #tpu.memory_space<vmem>>, vector<1x1x32xf32>
    %40 = vector.shape_cast %39 : vector<1x1x32xf32> to vector<1x32xf32>
    %41 = vector.shape_cast %37 : vector<1x32xf32> to vector<1x1x32xf32>
    tpu.vector_store %arg6[%c0_6, %38, %c0_7], %41 {strides = array<i32>} : memref<1x4x32xf32, #tpu.memory_space<vmem>>, vector<1x1x32xf32>,
    %c3_i32 = arith.constant 3 : i32
    %42 = arith.index_cast %arg0 : i32 to index
    %43 = arith.index_cast %c3_i32 : i32 to index
    %44 = memref.load %arg1[%42, %43] : memref<2x4xi32, #tpu.memory_space<smem>>
    %45 = arith.index_cast %44 : i32 to index
    %c0_8 = arith.constant 0 : index
    %46 = vector.load %arg3[%45, %c0_8] : memref<8x32xf32, #tpu.memory_space<vmem>>, vector<1x32xf32>
    %47 = arith.index_cast %arg0 : i32 to index
    %48 = arith.index_cast %c3_i32 : i32 to index
    %49 = memref.load %arg2[%47, %48] : memref<2x4xf32, #tpu.memory_space<smem>>
    %50 = vector.broadcast %49 : f32 to vector<1x32xf32>
    %51 = arith.mulf %46, %50 : vector<1x32xf32>
    %c0_9 = arith.constant 0 : index
    %52 = arith.index_cast %c3_i32 : i32 to index
    %c0_10 = arith.constant 0 : index
    %53 = vector.load %arg6[%c0_9, %52, %c0_10] : memref<1x4x32xf32, #tpu.memory_space<vmem>>, vector<1x1x32xf32>
    %54 = vector.shape_cast %53 : vector<1x1x32xf32> to vector<1x32xf32>
    %55 = vector.shape_cast %51 : vector<1x32xf32> to vector<1x1x32xf32>
    tpu.vector_store %arg6[%c0_9, %52, %c0_10], %55 {strides = array<i32>} : memref<1x4x32xf32, #tpu.memory_space<vmem>>, vector<1x1x32xf32>,
    %c4_i32 = arith.constant 4 : i32
    %c0_11 = arith.constant 0 : index
    %c0_12 = arith.constant 0 : index
    %c0_13 = arith.constant 0 : index
    %56 = vector.load %arg6[%c0_11, %c0_12, %c0_13] : memref<1x4x32xf32, #tpu.memory_space<vmem>>, vector<1x4x32xf32>
    %57 = vector.shape_cast %56 : vector<1x4x32xf32> to vector<4x32xf32>
    %cst = arith.constant dense<0xFF800000> : vector<32xf32>
    %58 = vector.multi_reduction <maximumf>, %57, %cst [0] : vector<4x32xf32> to vector<32xf32>
    %59 = vector.shape_cast %58 : vector<32xf32> to vector<1x32xf32>
    %c0_14 = arith.constant 0 : index
    %c0_15 = arith.constant 0 : index
    %c0_16 = arith.constant 0 : index
    %60 = vector.load %arg4[%c0_14, %c0_15, %c0_16] : memref<1x1x32xf32, #tpu.memory_space<vmem>>, vector<1x1x32xf32>
    %61 = vector.shape_cast %60 : vector<1x1x32xf32> to vector<1x32xf32>
    %62 = vector.shape_cast %59 : vector<1x32xf32> to vector<1x1x32xf32>
    tpu.vector_store %arg4[%c0_14, %c0_15, %c0_16], %62 {strides = array<i32>} : memref<1x1x32xf32, #tpu.memory_space<vmem>>, vector<1x1x32xf32>,
    %cst_17 = arith.constant dense<0.000000e+00> : vector<32xf32>
    %63 = vector.multi_reduction <add>, %57, %cst_17 [0] : vector<4x32xf32> to vector<32xf32>
    %64 = vector.shape_cast %63 : vector<32xf32> to vector<1x32xf32>
    %cst_18 = arith.constant 2.500000e-01 : f32
    %65 = vector.broadcast %cst_18 : f32 to vector<1x32xf32>
    %66 = arith.mulf %64, %65 : vector<1x32xf32>
    %c0_19 = arith.constant 0 : index
    %c0_20 = arith.constant 0 : index
    %c0_21 = arith.constant 0 : index
    %67 = vector.load %arg5[%c0_19, %c0_20, %c0_21] : memref<1x1x32xf32, #tpu.memory_space<vmem>>, vector<1x1x32xf32>
    %68 = vector.shape_cast %67 : vector<1x1x32xf32> to vector<1x32xf32>
    %69 = vector.shape_cast %66 : vector<1x32xf32> to vector<1x1x32xf32>
    tpu.vector_store %arg5[%c0_19, %c0_20, %c0_21], %69 {strides = array<i32>} : memref<1x1x32xf32, #tpu.memory_space<vmem>>, vector<1x1x32xf32>,
    return
  }
  func.func @transform_0(%arg0: i32, %arg1: memref<2x4xi32, #tpu.memory_space<smem>>, %arg2: memref<2x4xf32, #tpu.memory_space<smem>>) -> (i32, i32) {
    %c0_i32 = arith.constant 0 : i32
    %c0_i32_0 = arith.constant 0 : i32
    return %arg0, %c0_i32 : i32, i32
  }
  func.func @transform_1(%arg0: i32, %arg1: memref<2x4xi32, #tpu.memory_space<smem>>, %arg2: memref<2x4xf32, #tpu.memory_space<smem>>) -> (i32, i32, i32) {
    %c0_i32 = arith.constant 0 : i32
    %c0_i32_0 = arith.constant 0 : i32
    %c0_i32_1 = arith.constant 0 : i32
    return %arg0, %c0_i32, %c0_i32_0 : i32, i32, i32
  }
  func.func @transform_2(%arg0: i32, %arg1: memref<2x4xi32, #tpu.memory_space<smem>>, %arg2: memref<2x4xf32, #tpu.memory_space<smem>>) -> (i32, i32, i32) {
    %c0_i32 = arith.constant 0 : i32
    %c0_i32_0 = arith.constant 0 : i32
    %c0_i32_1 = arith.constant 0 : i32
    return %arg0, %c0_i32, %c0_i32_0 : i32, i32, i32
  }
  func.func @transform_3(%arg0: i32, %arg1: memref<2x4xi32, #tpu.memory_space<smem>>, %arg2: memref<2x4xf32, #tpu.memory_space<smem>>) -> (i32, i32, i32) {
    %c0_i32 = arith.constant 0 : i32
    %c0_i32_0 = arith.constant 0 : i32
    %c0_i32_1 = arith.constant 0 : i32
    return %arg0, %c0_i32, %c0_i32_0 : i32, i32, i32
  }
}

</mosaic_0001>

<llo_original>
// kernel: gcn_pool_block_forward.4
$region0: #{gcn_pool_block_forward.4}
  #allocation0 [shape = 'u32[]', space=smem, size = 0x4, offset = 0x4, fixed_abs, tag = 'smem constant byte address 0x4 - core index']
  #allocation1 [shape = 'u32[144,128]{1,0:T(1,128)}', space=vmem, size = 0x12000, scoped, tag = 'internal scratch']
  %s0 = inlined_call_operand.vmem [shape: s8[2,16,16], index: 0, kind: input, shape index: {}]
  %s1 = inlined_call_operand.vmem [shape: f32[32,32], index: 1, kind: input, shape index: {}]
  %s2 = inlined_call_operand.vmem [shape: f32[1,32], index: 2, kind: input, shape index: {}]
  %s3 = inlined_call_operand.vmem [shape: f32[1,32], index: 3, kind: input, shape index: {}]
  %s4 = inlined_call_operand.vmem [shape: f32[32,1], index: 4, kind: input, shape index: {}]
  %s5 = inlined_call_operand.vmem [shape: f32[32,32], index: 5, kind: output, shape index: {0}]
  %s6 = inlined_call_operand.vmem [shape: f32[2,1,16], index: 6, kind: output, shape index: {1}]
  %7 = xla_tuple %s5, %s6
  %s8 = sld [smem:[#allocation0]]
  $region61: #{gcn_pool_block_forward.4} parent=0
    _
  %s10 = ssub.s32 1, %s8
  %s11 = scalar_select 0, %s10, %s8
  loop: start=0, step=1, limit=4
  $region2: #{gcn_pool_block_forward.4} parent=0 // loop_pre_header
    _
  $region3: #{gcn_pool_block_forward.4} parent=0 // loop_header
    %s13 = sphi 0, %s17
    %p14 = scmp.ge.s32.totalorder %s13, 4
    %s20 = sphi 0, %s32
    %s21 = sphi 0, %s28
    %s22 = sphi 0, %s20
    %s23 = sphi 0, %s21
    %s24 = sphi 0, %s22
    %s25 = sphi 0, %s23
    %s37 = sphi 0, %s39
    %s40 = sphi 0, %s37
    %s41 = sphi 0, %s40
    %s57 = sphi 0, %s41
    %s63 = sphi 0, %s65
    %s66 = sphi 0, %s63
    %s67 = sphi 0, %s66
    %s83 = sphi 0, %s67
    %s87 = sphi 0, %s87
    %s89 = sphi 0, %s87
    %s90 = sphi 0, %s89
    %s104 = sphi 0, %s90
    %s108 = sphi 0, %s108
    %s110 = sphi 0, %s108
    %s111 = sphi 0, %s110
    %s125 = sphi 0, %s111
    %s133 = sphi 0, %s135
    %s136 = sphi 0, %s133
    %s137 = sphi 0, %s136
    %s153 = sphi 0, %s137
    %s161 = sphi 0, %s163
    %s164 = sphi 0, %s161
    %s165 = sphi 0, %s164
    %s181 = sphi 0, %s165
    %s189 = sphi 0, %s191
    %s192 = sphi 0, %s189
    %s193 = sphi 0, %s192
    %s209 = sphi 0, %s193
  $region4: #{gcn_pool_block_forward.4} parent=0 // loop_header_branch
    %16 = sbr.rel (%p14) target = $region8
  $region5: #{gcn_pool_block_forward.4} parent=0 // loop_body
    %s18 = ssub.s32 %s13, 1
    %s19 = ssub.s32 %s13, 2
    %s26 = sadd.s32 1, %s21
    %p27 = scmp.ge.s32.totalorder %s26, 1
    %s28 = scalar_select %p27, 0, %s26
    %s29 = sadd.s32 1, %s20
    %s30 = scalar_select %p27, %s29, %s20
    %p31 = scmp.ge.s32.totalorder %s30, 2
    %s32 = scalar_select %p31, 0, %s30
    %s33 = ssub.s32 %s20, %s32
    %s34 = ssub.s32 %s21, %s28
    %s35 = sor.u32 %s33, %s34
    %p36 = scmp.eq.s32.totalorder %s35, 0
    %s38 = sadd.s32 %s37, 1
    %s39 = scalar_select %p36, %s37, %s38
    %p42 = pneg %p36
    %p43 = scmp.eq.s32.totalorder %s13, 1
    %p44 = por %p42, %p43
    %p45 = scmp.ne.s32.totalorder %s37, %s40
    %p46 = scmp.eq.s32.totalorder %s13, 0
    %p47 = por %p45, %p46
    %p48 = scmp.ne.s32.totalorder %s37, %s40
    %p49 = scmp.eq.s32.totalorder %s18, 1
    %p50 = por %p48, %p49
    %p51 = scmp.ne.s32.totalorder %s40, %s41
    %p52 = scmp.eq.s32.totalorder %s18, 0
    %p53 = por %p51, %p52
    %p54 = scmp.ne.s32.totalorder %s40, %s41
    %p55 = scmp.eq.s32.totalorder %s19, 1
    %p56 = por %p54, %p55
    %p58 = scmp.ne.s32.totalorder %s41, %s57
    %p59 = scmp.eq.s32.totalorder %s19, 0
    %p60 = por %p58, %p59
    %s61 = ssub.s32 %s20, %s32
    %p62 = scmp.eq.s32.totalorder %s61, 0
    %s64 = sadd.s32 %s63, 1
    %s65 = scalar_select %p62, %s63, %s64
    %p68 = pneg %p62
    %p69 = scmp.eq.s32.totalorder %s13, 1
    %p70 = por %p68, %p69
    %p71 = scmp.ne.s32.totalorder %s63, %s66
    %p72 = scmp.eq.s32.totalorder %s13, 0
    %p73 = por %p71, %p72
    %p74 = scmp.ne.s32.totalorder %s63, %s66
    %p75 = scmp.eq.s32.totalorder %s18, 1
    %p76 = por %p74, %p75
    %p77 = scmp.ne.s32.totalorder %s66, %s67
    %p78 = scmp.eq.s32.totalorder %s18, 0
    %p79 = por %p77, %p78
    %p80 = scmp.ne.s32.totalorder %s66, %s67
    %p81 = scmp.eq.s32.totalorder %s19, 1
    %p82 = por %p80, %p81
    %p84 = scmp.ne.s32.totalorder %s67, %s83
    %p85 = scmp.eq.s32.totalorder %s19, 0
    %p86 = por %p84, %p85
    %s88 = sadd.s32 %s87, 1
    %p91 = scmp.eq.s32.totalorder %s13, 1
    %p92 = scmp.ne.s32.totalorder %s87, %s89
    %p93 = scmp.eq.s32.totalorder %s13, 0
    %p94 = por %p92, %p93
    %p95 = scmp.ne.s32.totalorder %s87, %s89
    %p96 = scmp.eq.s32.totalorder %s18, 1
    %p97 = por %p95, %p96
    %p98 = scmp.ne.s32.totalorder %s89, %s90
    %p99 = scmp.eq.s32.totalorder %s18, 0
    %p100 = por %p98, %p99
    %p101 = scmp.ne.s32.totalorder %s89, %s90
    %p102 = scmp.eq.s32.totalorder %s19, 1
    %p103 = por %p101, %p102
    %p105 = scmp.ne.s32.totalorder %s90, %s104
    %p106 = scmp.eq.s32.totalorder %s19, 0
    %p107 = por %p105, %p106
    %s109 = sadd.s32 %s108, 1
    %p112 = scmp.eq.s32.totalorder %s13, 1
    %p113 = scmp.ne.s32.totalorder %s108, %s110
    %p114 = scmp.eq.s32.totalorder %s13, 0
    %p115 = por %p113, %p114
    %p116 = scmp.ne.s32.totalorder %s108, %s110
    %p117 = scmp.eq.s32.totalorder %s18, 1
    %p118 = por %p116, %p117
    %p119 = scmp.ne.s32.totalorder %s110, %s111
    %p120 = scmp.eq.s32.totalorder %s18, 0
    %p121 = por %p119, %p120
    %p122 = scmp.ne.s32.totalorder %s110, %s111
    %p123 = scmp.eq.s32.totalorder %s19, 1
    %p124 = por %p122, %p123
    %p126 = scmp.ne.s32.totalorder %s111, %s125
    %p127 = scmp.eq.s32.totalorder %s19, 0
    %p128 = por %p126, %p127
    %s129 = sadd.s32 %s20, %s21
    %s130 = sadd.s32 %s32, %s28
    %s131 = ssub.s32 %s129, %s130
    %p132 = scmp.eq.s32.totalorder %s131, 0
    %s134 = sadd.s32 %s133, 1
    %s135 = scalar_select %p132, %s133, %s134
    %p138 = pneg %p132
    %p139 = scmp.eq.s32.totalorder %s13, 1
    %p140 = por %p138, %p139
    %p141 = scmp.ne.s32.totalorder %s133, %s136
    %p142 = scmp.eq.s32.totalorder %s13, 0
    %p143 = por %p141, %p142
    %p144 = scmp.ne.s32.totalorder %s133, %s136
    %p145 = scmp.eq.s32.totalorder %s18, 1
    %p146 = por %p144, %p145
    %p147 = scmp.ne.s32.totalorder %s136, %s137
    %p148 = scmp.eq.s32.totalorder %s18, 0
    %p149 = por %p147, %p148
    %p150 = scmp.ne.s32.totalorder %s136, %s137
    %p151 = scmp.eq.s32.totalorder %s19, 1
    %p152 = por %p150, %p151
    %p154 = scmp.ne.s32.totalorder %s137, %s153
    %p155 = scmp.eq.s32.totalorder %s19, 0
    %p156 = por %p154, %p155
    %s157 = sadd.s32 %s20, %s21
    %s158 = sadd.s32 %s32, %s28
    %s159 = ssub.s32 %s157, %s158
    %p160 = scmp.eq.s32.totalorder %s159, 0
    %s162 = sadd.s32 %s161, 1
    %s163 = scalar_select %p160, %s161, %s162
    %p166 = pneg %p160
    %p167 = scmp.eq.s32.totalorder %s13, 1
    %p168 = por %p166, %p167
    %p169 = scmp.ne.s32.totalorder %s161, %s164
    %p170 = scmp.eq.s32.totalorder %s13, 0
    %p171 = por %p169, %p170
    %p172 = scmp.ne.s32.totalorder %s161, %s164
    %p173 = scmp.eq.s32.totalorder %s18, 1
    %p174 = por %p172, %p173
    %p175 = scmp.ne.s32.totalorder %s164, %s165
    %p176 = scmp.eq.s32.totalorder %s18, 0
    %p177 = por %p175, %p176
    %p178 = scmp.ne.s32.totalorder %s164, %s165
    %p179 = scmp.eq.s32.totalorder %s19, 1
    %p180 = por %p178, %p179
    %p182 = scmp.ne.s32.totalorder %s165, %s181
    %p183 = scmp.eq.s32.totalorder %s19, 0
    %p184 = por %p182, %p183
    %s185 = ssub.s32 %s20, %s32
    %s186 = ssub.s32 %s21, %s28
    %s187 = sor.u32 %s185, %s186
    %p188 = scmp.eq.s32.totalorder %s187, 0
    %s190 = sadd.s32 %s189, 1
    %s191 = scalar_select %p188, %s189, %s190
    %p194 = pneg %p188
    %p195 = scmp.eq.s32.totalorder %s13, 1
    %p196 = por %p194, %p195
    %p197 = scmp.ne.s32.totalorder %s189, %s192
    %p198 = scmp.eq.s32.totalorder %s13, 0
    %p199 = por %p197, %p198
    %p200 = scmp.ne.s32.totalorder %s189, %s192
    %p201 = scmp.eq.s32.totalorder %s18, 1
    %p202 = por %p200, %p201
    %p203 = scmp.ne.s32.totalorder %s192, %s193
    %p204 = scmp.eq.s32.totalorder %s18, 0
    %p205 = por %p203, %p204
    %p206 = scmp.ne.s32.totalorder %s192, %s193
    %p207 = scmp.eq.s32.totalorder %s19, 1
    %p208 = por %p206, %p207
    %p210 = scmp.ne.s32.totalorder %s193, %s209
    %p211 = scmp.eq.s32.totalorder %s19, 0
    %p212 = por %p210, %p211
    %p213 = scmp.le.s32.totalorder 1, %s13
    %p214 = scmp.lt.s32.totalorder %s13, 3
    %p215 = pnand %p213, %p214
    %p216 = pneg %p215
    // Predicated region
    $region9: #{gcn_pool_block_forward.4} parent=5 // pred_check
      _
    $region10: #{gcn_pool_block_forward.4} parent=5 // pred_check_branch
      %218 = sbr.rel (%p215) target = $region12
    $region11: #{gcn_pool_block_forward.4} parent=5 // pred_region
      %s219 = ssub.s32 %s13, 1
      // Predicated region
      $region13: #{gcn_pool_block_forward.4} parent=11 // pred_check
        %p220 = pneg %p100
      $region14: #{gcn_pool_block_forward.4} parent=11 // pred_check_branch
        %222 = sbr.rel (%p220) target = $region16
      $region15: #{gcn_pool_block_forward.4} parent=11 // pred_region
        _
      $region16: #{gcn_pool_block_forward.4} parent=11 // pred_fallthru
        _
      // Predicated region
      $region17: #{gcn_pool_block_forward.4} parent=11 // pred_check
        %p223 = pneg %p121
      $region18: #{gcn_pool_block_forward.4} parent=11 // pred_check_branch
        %225 = sbr.rel (%p223) target = $region20
      $region19: #{gcn_pool_block_forward.4} parent=11 // pred_region
        _
      $region20: #{gcn_pool_block_forward.4} parent=11 // pred_fallthru
        _
    $region12: #{gcn_pool_block_forward.4} parent=5 // pred_fallthru
      _
    %p226 = scmp.lt.s32.totalorder %s13, 2
    // Predicated region
    $region21: #{gcn_pool_block_forward.4} parent=5 // pred_check
      %p227 = pneg %p226
    $region22: #{gcn_pool_block_forward.4} parent=5 // pred_check_branch
      %229 = sbr.rel (%p227) target = $region24
    $region23: #{gcn_pool_block_forward.4} parent=5 // pred_region
      // Predicated region
      $region25: #{gcn_pool_block_forward.4} parent=23 // pred_check
        %p230 = pneg %p47
      $region26: #{gcn_pool_block_forward.4} parent=23 // pred_check_branch
        %232 = sbr.rel (%p230) target = $region28
      $region27: #{gcn_pool_block_forward.4} parent=23 // pred_region
        %s233 = smul.u32 2, %s21
        %p234 = scmp.lt.s32.totalorder %s20, 1
        %s235 = scalar_select %p234, %s20, 1
        %p236 = scmp.lt.s32.totalorder %s233, 1
        %s237 = scalar_select %p236, %s233, 1
        %s238 = smul.addr %s235, 2
        %s239 = sadd.s32 %s237, %s238
        %s240 = smul.addr %s239, 2
        %s241 = scalar_lea.vmem %s0, %s240
        %s242 = smul.u32 2, %s21
      $region28: #{gcn_pool_block_forward.4} parent=23 // pred_fallthru
        _
      // Predicated region
      $region29: #{gcn_pool_block_forward.4} parent=23 // pred_check
        %p243 = pneg %p73
      $region30: #{gcn_pool_block_forward.4} parent=23 // pred_check_branch
        %245 = sbr.rel (%p243) target = $region32
      $region31: #{gcn_pool_block_forward.4} parent=23 // pred_region
        %s246 = smul.u32 2, %s20
        %p247 = scmp.lt.s32.totalorder %s246, 3
        %s248 = scalar_select %p247, %s246, 3
        %s249 = smul.addr %s248, 8
        %s250 = scalar_lea.vmem %s1, %s249
        %s251 = smul.u32 2, %s20
      $region32: #{gcn_pool_block_forward.4} parent=23 // pred_fallthru
        _
      // Predicated region
      $region33: #{gcn_pool_block_forward.4} parent=23 // pred_check
        %p252 = pneg %p143
      $region34: #{gcn_pool_block_forward.4} parent=23 // pred_check_branch
        %254 = sbr.rel (%p252) target = $region36
      $region35: #{gcn_pool_block_forward.4} parent=23 // pred_region
        %s255 = sadd.s32 %s20, %s21
        %s256 = smul.u32 2, %s255
        %p257 = scmp.lt.s32.totalorder %s256, 3
        %s258 = scalar_select %p257, %s256, 3
        %s259 = smul.addr %s258, 8
        %s260 = scalar_lea.vmem %s4, %s259
        %s261 = sadd.s32 %s20, %s21
        %s262 = smul.u32 2, %s261
      $region36: #{gcn_pool_block_forward.4} parent=23 // pred_fallthru
        _
    $region24: #{gcn_pool_block_forward.4} parent=5 // pred_fallthru
      _
    %p263 = scmp.le.s32.totalorder 1, %s13
    %p264 = scmp.lt.s32.totalorder %s13, 3
    %p265 = pnand %p263, %p264
    %p266 = pneg %p265
    // Predicated region
    $region37: #{gcn_pool_block_forward.4} parent=5 // pred_check
      _
    $region38: #{gcn_pool_block_forward.4} parent=5 // pred_check_branch
      %268 = sbr.rel (%p265) target = $region40
    $region39: #{gcn_pool_block_forward.4} parent=5 // pred_region
      %s269 = ssub.s32 %s13, 1
      %s270 = smul.u32 2, %s23
      %p271 = scmp.lt.s32.totalorder %s22, 1
      %s272 = scalar_select %p271, %s22, 1
      %p273 = scmp.lt.s32.totalorder %s270, 1
      %s274 = scalar_select %p273, %s270, 1
      %s275 = smul.addr %s272, 2
      %s276 = sadd.s32 %s274, %s275
      %s277 = smul.addr %s276, 2
      %s278 = scalar_lea.vmem %s0, %s277
      %p279 = pneg %p53
      %p280 = pneg %p50
      %s281 = smul.u32 2, %s22
      %p282 = scmp.lt.s32.totalorder %s281, 3
      %s283 = scalar_select %p282, %s281, 3
      %s284 = smul.addr %s283, 8
      %s285 = scalar_lea.vmem %s1, %s284
      %p286 = pneg %p79
      %p287 = pneg %p76
      %p288 = pneg %p100
      %p289 = pneg %p97
      %p290 = pneg %p121
      %p291 = pneg %p118
      %s292 = sadd.s32 %s22, %s23
      %s293 = smul.u32 2, %s292
      %p294 = scmp.lt.s32.totalorder %s293, 3
      %s295 = scalar_select %p294, %s293, 3
      %s296 = smul.addr %s295, 8
      %s297 = scalar_lea.vmem %s4, %s296
      %p298 = pneg %p149
      %p299 = pneg %p146
      %p300 = pneg %p177
      %p301 = pneg %p174
      %s302 = sadd.s32 %s22, %s23
      %s303 = smul.u32 2, %s302
      %p304 = scmp.lt.s32.totalorder %s303, 3
      %s305 = scalar_select %p304, %s303, 3
      %s306 = smul.addr %s305, 8
      %s307 = scalar_lea.vmem %s5, %s306
      %p308 = pneg %p205
      %p309 = pneg %p202
      %p310 = scmp.lt.s32.totalorder %s22, 1
      %s311 = scalar_select %p310, %s22, 1
      %p312 = scmp.lt.s32.totalorder %s23, 0
      %s313 = scalar_select %p312, %s23, 0
      %s314 = sadd.s32 %s313, %s311
      %s315 = scalar_lea.vmem %s6, %s314
      %s316 = smul.u32 2, %s23
      %p317 = scmp.lt.s32.totalorder %s22, 1
      %s318 = scalar_select %p317, %s22, 1
      %p319 = scmp.lt.s32.totalorder %s316, 1
      %s320 = scalar_select %p319, %s316, 1
      %s321 = smul.addr %s318, 2
      %s322 = sadd.s32 %s320, %s321
      %s323 = smul.addr %s322, 2
      %s324 = scalar_lea.vmem %s0, %s323
      %s325 = smul.u32 2, %s23
      %s326 = smul.u32 2, %s22
      %p327 = scmp.lt.s32.totalorder %s326, 3
      %s328 = scalar_select %p327, %s326, 3
      %s329 = smul.addr %s328, 8
      %s330 = scalar_lea.vmem %s1, %s329
      %s331 = smul.u32 2, %s22
      %s332 = sadd.s32 %s22, %s23
      %s333 = smul.u32 2, %s332
      %p334 = scmp.lt.s32.totalorder %s333, 3
      %s335 = scalar_select %p334, %s333, 3
      %s336 = smul.addr %s335, 8
      %s337 = scalar_lea.vmem %s4, %s336
      %s338 = sadd.s32 %s22, %s23
      %s339 = smul.u32 2, %s338
      %s340 = sadd.s32 %s22, %s23
      %s341 = smul.u32 2, %s340
      %p342 = scmp.lt.s32.totalorder %s341, 3
      %s343 = scalar_select %p342, %s341, 3
      %s344 = smul.addr %s343, 8
      %s345 = scalar_lea.vmem %s5, %s344
      %s346 = sadd.s32 %s22, %s23
      %s347 = smul.u32 2, %s346
      %p348 = scmp.lt.s32.totalorder %s22, 1
      %s349 = scalar_select %p348, %s22, 1
      %p350 = scmp.lt.s32.totalorder %s23, 0
      %s351 = scalar_select %p350, %s23, 0
      %s352 = sadd.s32 %s351, %s349
      %s353 = scalar_lea.vmem %s6, %s352
      %s354 = smul.u32 %s23, 16
      %v355 = vld [vmem:[%s324] sm:$0x3]
      %v356 = vld [vmem:[%s324 + $0x2] sm:$0x3]
      %v357 = vunpack.c.0.s8 %v355
      %v358 = vunpack.c.0.s8 %v356
      %v359 = vcvt.s32.f32 %v357
      %v360 = vcvt.s32.f32 %v358
      %v361 = vld [vmem:[%s330] sm:$0xff]
      %v362 = vld [vmem:[%s330 + $0x8] sm:$0xff]
      %s363 = scalar_lea.vmem %s330, %s354
      %v364 = vld [vmem:[%s363] sm:$0xff]
      %v365 = vld [vmem:[%s363 + $0x8] sm:$0xff]
      %v366 = vld [vmem:[%s337] sm:$0xff]
      %v367 = vld [vmem:[%s337 + $0x8] sm:$0xff]
      %vm368 = vcmask 130048
      %v370 = vsel %vm368, %v359, 0
      %v373 = vsel %vm368, %v360, 0
      %375 = vmatprep.subr.mxu0 0.0
      %376 = vmatpush1.msra.mxu0 %v361
      %377 = vmatprep.subr.mxu0 0.0
      %378 = vmatpush1.msra.mxu0 %v362
      %379 = vmatprep.subr.mxu0 0.0
      %380 = vmatpush1.msra.mxu0 0.0
      %381 = vmatprep.subr.mxu0 0.0
      %382 = vmatpush1.msra.mxu0 0.0
      %383 = vmatprep.subr.mxu0 0.0
      %384 = vmatpush1.msra.mxu0 0.0
      %385 = vmatprep.subr.mxu0 0.0
      %386 = vmatpush1.msra.mxu0 0.0
      %387 = vmatprep.subr.mxu0 0.0
      %388 = vmatpush1.msra.mxu0 0.0
      %389 = vmatprep.subr.mxu0 0.0
      %390 = vmatpush1.msra.mxu0 0.0
      %391 = vmatprep.subr.mxu0 0.0
      %392 = vmatpush1.msra.mxu0 0.0
      %393 = vmatprep.subr.mxu0 0.0
      %394 = vmatpush1.msra.mxu0 0.0
      %395 = vmatprep.subr.mxu0 0.0
      %396 = vmatpush1.msra.mxu0 0.0
      %397 = vmatprep.subr.mxu0 0.0
      %398 = vmatpush1.msra.mxu0 0.0
      %399 = vmatprep.subr.mxu0 0.0
      %400 = vmatpush1.msra.mxu0 0.0
      %401 = vmatprep.subr.mxu0 0.0
      %402 = vmatpush1.msra.mxu0 0.0
      %403 = vmatprep.subr.mxu0 0.0
      %404 = vmatpush1.msra.mxu0 0.0
      %405 = vmatprep.subr.mxu0 0.0
      %406 = vmatpush1.msra.mxu0 0.0
      %407 = vmatprep.subr.mxu0 0.0
      %408 = vmatpush1.msra.mxu0 0.0
      %409 = vmatprep.subr.mxu0 0.0
      %410 = vmatpush1.msra.mxu0 0.0
      %411 = vmatprep.subr.mxu0 0.0
      %412 = vmatpush1.msra.mxu0 0.0
      %413 = vmatprep.subr.mxu0 0.0
      %414 = vmatpush1.msra.mxu0 0.0
      %415 = vmatprep.subr.mxu0 0.0
      %416 = vmatpush1.msra.mxu0 0.0
      %417 = vmatprep.subr.mxu0 0.0
      %418 = vmatpush1.msra.mxu0 0.0
      %419 = vmatprep.subr.mxu0 0.0
      %420 = vmatpush1.msra.mxu0 0.0
      %421 = vmatprep.subr.mxu0 0.0
      %422 = vmatpush1.msra.mxu0 0.0
      %423 = vmatprep.subr.mxu0 0.0
      %424 = vmatpush1.msra.mxu0 0.0
      %425 = vmatprep.subr.mxu0 0.0
      %426 = vmatpush1.msra.mxu0 0.0
      %427 = vmatprep.subr.mxu0 0.0
      %428 = vmatpush1.msra.mxu0 0.0
      %429 = vmatprep.subr.mxu0 0.0
      %430 = vmatpush1.msra.mxu0 0.0
      %431 = vmatprep.subr.mxu0 0.0
      %432 = vmatpush1.msra.mxu0 0.0
      %433 = vmatprep.subr.mxu0 0.0
      %434 = vmatpush1.msra.mxu0 0.0
      %435 = vmatprep.subr.mxu0 0.0
      %436 = vmatpush1.msra.mxu0 0.0
      %437 = vmatprep.subr.mxu0 0.0
      %438 = vmatpush1.msra.mxu0 0.0
      %439 = vmatprep.mubr.f32.mxu0 0.0
      %440 = vmatmul.mubr.f32.gmra.mrb[0].mxu0 %v370
      %v441 = vpop.f32.mrb[0].mxu0
      %v442 = vadd.f32 %v364, %v441
      %v443 = vpop.f32.mrb[0].mxu0
      %444 = vmatprep.mubr.f32.mxu0 0.0
      %445 = vmatmul.mubr.f32.gmra.mrb[0].mxu0 %v373
      %v446 = vpop.f32.mrb[0].mxu0
      %v447 = vadd.f32 %v365, %v446
      %v448 = vpop.f32.mrb[0].mxu0
      %449 = vdwg.mxu0
      %451 = vset.pattern.permute.xlu0 0
      %452 = vperm.xlu0 %451, %v366
      %v453 = vpop.permute.xlu0 %452
      %456 = vset.pattern.permute.xlu0 0
      %457 = vperm.xlu0 %456, %v367
      %v458 = vpop.permute.xlu0 %457
      %v460 = vmul.f32 %v453, %v442
      %v461 = vmul.f32 %v458, %v447
      %v462 = vld [vmem:[%s2] sm:$0x1]
      %v464 = vlaneseq
      %v465 = vshrl.u32 %v464, 7
      %v466 = vsub.s32 0, %v465
      %v467 = vrot.slane %v462, %v466
      %v469 = vadd.f32 %v460, %v467
      %v470 = vadd.f32 %v461, %v467
      %v471 = vmax.f32 %v469, 0.0
      %v472 = vmax.f32 %v470, 0.0
      %vm473 = vcmask 261120
      %474 = vst.msk [vmem:[%s345] sm:$0xff] %vm473, %v471
      %475 = vst.msk [vmem:[%s345 + $0x8] sm:$0xff] %vm473, %v472
      %v476 = vld [vmem:[%s3] sm:$0x1]
      %v478 = vlaneseq
      %v479 = vshrl.u32 %v478, 7
      %v480 = vsub.s32 0, %v479
      %v481 = vrot.slane %v476, %v480
      %v483 = vmul.f32 %v471, %v481
      %v484 = vmul.f32 %v472, %v481
      %v485 = vsel %vm473, %v483, 0.0
      %486 = vadd.xlane.f32.xlu0 %v485
      %v487 = vpop.xlane.xlu0 %486
      %v488 = vsel %vm473, %v484, 0.0
      %489 = vadd.xlane.f32.xlu0 %v488
      %v490 = vpop.xlane.xlu0 %489
      %v491 = vtanh.pop %v487
      %v492 = vtanh.pop %v490
      %v495 = vlaneseq
      %v496 = vand.u32 %v495, 127
      %v497 = vlaneseq
      %v498 = vshrl.u32 %v497, 7
      %v499 = vsub.s32 %v496, %v498
      %v500 = vrot.slane %v491, %v499
      %v501 = vadd.s32 %v496, 4294967288
      %v502 = vlaneseq
      %v503 = vshrl.u32 %v502, 7
      %v504 = vsub.s32 %v501, %v503
      %v505 = vrot.slane %v492, %v504
      %vm506 = vcmask 130112
      %v507 = vsel %vm506, %v505, %v500
      %vm509 = vcmask 122880
      %510 = vst.msk [vmem:[%s353] sm:$0x1] %vm509, %v507
      %s511 = sadd.s32 %s22, %s23
      %s512 = smul.u32 2, %s511
      %p513 = scmp.lt.s32.totalorder %s512, 3
      %s514 = scalar_select %p513, %s512, 3
      %s515 = smul.addr %s514, 8
      %s516 = scalar_lea.vmem %s5, %s515
      %p517 = scmp.lt.s32.totalorder %s22, 1
      %s518 = scalar_select %p517, %s22, 1
      %p519 = scmp.lt.s32.totalorder %s23, 0
      %s520 = scalar_select %p519, %s23, 0
      %s521 = sadd.s32 %s520, %s518
      %s522 = scalar_lea.vmem %s6, %s521
      // Predicated region
      $region41: #{gcn_pool_block_forward.4} parent=39 // pred_check
        %p523 = pneg %p174
      $region42: #{gcn_pool_block_forward.4} parent=39 // pred_check_branch
        %525 = sbr.rel (%p523) target = $region44
      $region43: #{gcn_pool_block_forward.4} parent=39 // pred_region
        %s526 = sadd.s32 %s22, %s23
        %s527 = smul.u32 2, %s526
      $region44: #{gcn_pool_block_forward.4} parent=39 // pred_fallthru
        _
      // Predicated region
      $region45: #{gcn_pool_block_forward.4} parent=39 // pred_check
        %p528 = pneg %p202
      $region46: #{gcn_pool_block_forward.4} parent=39 // pred_check_branch
        %530 = sbr.rel (%p528) target = $region48
      $region47: #{gcn_pool_block_forward.4} parent=39 // pred_region
        _
      $region48: #{gcn_pool_block_forward.4} parent=39 // pred_fallthru
        _
    $region40: #{gcn_pool_block_forward.4} parent=5 // pred_fallthru
      _
    %p531 = scmp.le.s32.totalorder 2, %s13
    // Predicated region
    $region49: #{gcn_pool_block_forward.4} parent=5 // pred_check
      %p532 = pneg %p531
    $region50: #{gcn_pool_block_forward.4} parent=5 // pred_check_branch
      %534 = sbr.rel (%p532) target = $region52
    $region51: #{gcn_pool_block_forward.4} parent=5 // pred_region
      %s535 = ssub.s32 %s13, 2
      // Predicated region
      $region53: #{gcn_pool_block_forward.4} parent=51 // pred_check
        %p536 = pneg %p180
      $region54: #{gcn_pool_block_forward.4} parent=51 // pred_check_branch
        %538 = sbr.rel (%p536) target = $region56
      $region55: #{gcn_pool_block_forward.4} parent=51 // pred_region
        %s539 = sadd.s32 %s24, %s25
        %s540 = smul.u32 2, %s539
        %p541 = scmp.lt.s32.totalorder %s540, 3
        %s542 = scalar_select %p541, %s540, 3
        %s543 = smul.addr %s542, 8
        %s544 = scalar_lea.vmem %s5, %s543
      $region56: #{gcn_pool_block_forward.4} parent=51 // pred_fallthru
        _
      // Predicated region
      $region57: #{gcn_pool_block_forward.4} parent=51 // pred_check
        %p545 = pneg %p208
      $region58: #{gcn_pool_block_forward.4} parent=51 // pred_check_branch
        %547 = sbr.rel (%p545) target = $region60
      $region59: #{gcn_pool_block_forward.4} parent=51 // pred_region
        %p548 = scmp.lt.s32.totalorder %s24, 1
        %s549 = scalar_select %p548, %s24, 1
        %p550 = scmp.lt.s32.totalorder %s25, 0
        %s551 = scalar_select %p550, %s25, 0
        %s552 = sadd.s32 %s551, %s549
        %s553 = scalar_lea.vmem %s6, %s552
      $region60: #{gcn_pool_block_forward.4} parent=51 // pred_fallthru
        _
    $region52: #{gcn_pool_block_forward.4} parent=5 // pred_fallthru
      _
  $region6: #{gcn_pool_block_forward.4} parent=0 // loop_footer
    %s17 = sadd.s32 1, %s13
  $region7: #{gcn_pool_block_forward.4} parent=0 // loop_footer_branch
    %12 = sbr.rel target = $region3
  $region8: #{gcn_pool_block_forward.4} parent=0 // loop_exit
    _

// kernel: gcn_pool_block_forward.5
$region0: #{gcn_pool_block_forward.5}
  #allocation0 [shape = 'u32[]', space=smem, size = 0x4, offset = 0x4, fixed_abs, tag = 'smem constant byte address 0x4 - core index']
  #allocation1 [shape = 'u32[144,128]{1,0:T(1,128)}', space=vmem, size = 0x12000, scoped, tag = 'internal scratch']
  #allocation2 [shape = 's32[1]{0}', space=sflag, size = 0x4, scoped, tag = 'scoped memory for gcn_pool_block_forward.5']
  #allocation3 [shape = 'u8[1024]{0}', space=smem, size = 0x400, scoped, tag = 'prefetched SMEM operand 0']
  #allocation4 [shape = 'u8[1024]{0}', space=smem, size = 0x400, scoped, tag = 'prefetched SMEM operand 1']
  %s0 = inlined_call_operand.vmem [shape: s32[2,8], index: 0, kind: input, shape index: {}]
  %s1 = inlined_call_operand.vmem [shape: f32[2,8], index: 1, kind: input, shape index: {}]
  %s2 = inlined_call_operand.vmem [shape: f32[32,32], index: 2, kind: input, shape index: {}]
  %s3 = inlined_call_operand.vmem [shape: f32[2,1,32], index: 3, kind: output, shape index: {0}]
  %s4 = inlined_call_operand.vmem [shape: f32[2,1,32], index: 4, kind: output, shape index: {1}]
  %s5 = inlined_call_operand.vmem [shape: f32[2,8,32], index: 5, kind: output, shape index: {2}]
  %6 = xla_tuple %s3, %s4, %s5
  %s7 = sld [smem:[#allocation0]]
  $region53: #{gcn_pool_block_forward.5} parent=0
    _
  %s9 = ssub.s32 1, %s7
  %s10 = scalar_select 0, %s9, %s7
  %s11 = sshll.u32 %s0, 4
  %s12 = int_to_ptr.vmem [resolvable:$true] %s11
  %14 = dma.vmem_to_smem %s12, 32, [#allocation3], [#allocation2]
  %s15 = sshll.u32 %s1, 4
  %s16 = int_to_ptr.vmem [resolvable:$true] %s15
  %18 = dma.vmem_to_smem %s16, 32, [#allocation4], [#allocation2]
  %19 = dma.done [#allocation2], 64
  %20 = sfence
  loop: start=0, step=1, limit=4
  $region2: #{gcn_pool_block_forward.5} parent=0 // loop_pre_header
    _
  $region3: #{gcn_pool_block_forward.5} parent=0 // loop_header
    %s22 = sphi 0, %s26
    %p23 = scmp.ge.s32.totalorder %s22, 4
    %s32 = sphi 0, %s34
    %s35 = sphi 0, %s32
    %s36 = sphi 0, %s35
    %s52 = sphi 0, %s36
    %s58 = sphi 0, %s60
    %s61 = sphi 0, %s58
    %s62 = sphi 0, %s61
    %s78 = sphi 0, %s62
    %s84 = sphi 0, %s86
    %s87 = sphi 0, %s84
    %s88 = sphi 0, %s87
    %s104 = sphi 0, %s88
    %s110 = sphi 0, %s112
    %s113 = sphi 0, %s110
    %s114 = sphi 0, %s113
    %s130 = sphi 0, %s114
  $region4: #{gcn_pool_block_forward.5} parent=0 // loop_header_branch
    %25 = sbr.rel (%p23) target = $region8
  $region5: #{gcn_pool_block_forward.5} parent=0 // loop_body
    %s27 = ssub.s32 %s22, 1
    %s28 = ssub.s32 %s22, 2
    %s29 = sadd.s32 %s22, 1
    %s30 = ssub.s32 %s22, %s29
    %p31 = scmp.eq.s32.totalorder %s30, 0
    %s33 = sadd.s32 %s32, 1
    %s34 = scalar_select %p31, %s32, %s33
    %p37 = pneg %p31
    %p38 = scmp.eq.s32.totalorder %s22, 1
    %p39 = por %p37, %p38
    %p40 = scmp.ne.s32.totalorder %s32, %s35
    %p41 = scmp.eq.s32.totalorder %s22, 0
    %p42 = por %p40, %p41
    %p43 = scmp.ne.s32.totalorder %s32, %s35
    %p44 = scmp.eq.s32.totalorder %s27, 1
    %p45 = por %p43, %p44
    %p46 = scmp.ne.s32.totalorder %s35, %s36
    %p47 = scmp.eq.s32.totalorder %s27, 0
    %p48 = por %p46, %p47
    %p49 = scmp.ne.s32.totalorder %s35, %s36
    %p50 = scmp.eq.s32.totalorder %s28, 1
    %p51 = por %p49, %p50
    %p53 = scmp.ne.s32.totalorder %s36, %s52
    %p54 = scmp.eq.s32.totalorder %s28, 0
    %p55 = por %p53, %p54
    %s56 = ssub.s32 %s22, %s29
    %p57 = scmp.eq.s32.totalorder %s56, 0
    %s59 = sadd.s32 %s58, 1
    %s60 = scalar_select %p57, %s58, %s59
    %p63 = pneg %p57
    %p64 = scmp.eq.s32.totalorder %s22, 1
    %p65 = por %p63, %p64
    %p66 = scmp.ne.s32.totalorder %s58, %s61
    %p67 = scmp.eq.s32.totalorder %s22, 0
    %p68 = por %p66, %p67
    %p69 = scmp.ne.s32.totalorder %s58, %s61
    %p70 = scmp.eq.s32.totalorder %s27, 1
    %p71 = por %p69, %p70
    %p72 = scmp.ne.s32.totalorder %s61, %s62
    %p73 = scmp.eq.s32.totalorder %s27, 0
    %p74 = por %p72, %p73
    %p75 = scmp.ne.s32.totalorder %s61, %s62
    %p76 = scmp.eq.s32.totalorder %s28, 1
    %p77 = por %p75, %p76
    %p79 = scmp.ne.s32.totalorder %s62, %s78
    %p80 = scmp.eq.s32.totalorder %s28, 0
    %p81 = por %p79, %p80
    %s82 = ssub.s32 %s22, %s29
    %p83 = scmp.eq.s32.totalorder %s82, 0
    %s85 = sadd.s32 %s84, 1
    %s86 = scalar_select %p83, %s84, %s85
    %p89 = pneg %p83
    %p90 = scmp.eq.s32.totalorder %s22, 1
    %p91 = por %p89, %p90
    %p92 = scmp.ne.s32.totalorder %s84, %s87
    %p93 = scmp.eq.s32.totalorder %s22, 0
    %p94 = por %p92, %p93
    %p95 = scmp.ne.s32.totalorder %s84, %s87
    %p96 = scmp.eq.s32.totalorder %s27, 1
    %p97 = por %p95, %p96
    %p98 = scmp.ne.s32.totalorder %s87, %s88
    %p99 = scmp.eq.s32.totalorder %s27, 0
    %p100 = por %p98, %p99
    %p101 = scmp.ne.s32.totalorder %s87, %s88
    %p102 = scmp.eq.s32.totalorder %s28, 1
    %p103 = por %p101, %p102
    %p105 = scmp.ne.s32.totalorder %s88, %s104
    %p106 = scmp.eq.s32.totalorder %s28, 0
    %p107 = por %p105, %p106
    %s108 = ssub.s32 %s22, %s29
    %p109 = scmp.eq.s32.totalorder %s108, 0
    %s111 = sadd.s32 %s110, 1
    %s112 = scalar_select %p109, %s110, %s111
    %p115 = pneg %p109
    %p116 = scmp.eq.s32.totalorder %s22, 1
    %p117 = por %p115, %p116
    %p118 = scmp.ne.s32.totalorder %s110, %s113
    %p119 = scmp.eq.s32.totalorder %s22, 0
    %p120 = por %p118, %p119
    %p121 = scmp.ne.s32.totalorder %s110, %s113
    %p122 = scmp.eq.s32.totalorder %s27, 1
    %p123 = por %p121, %p122
    %p124 = scmp.ne.s32.totalorder %s113, %s114
    %p125 = scmp.eq.s32.totalorder %s27, 0
    %p126 = por %p124, %p125
    %p127 = scmp.ne.s32.totalorder %s113, %s114
    %p128 = scmp.eq.s32.totalorder %s28, 1
    %p129 = por %p127, %p128
    %p131 = scmp.ne.s32.totalorder %s114, %s130
    %p132 = scmp.eq.s32.totalorder %s28, 0
    %p133 = por %p131, %p132
    %p134 = scmp.le.s32.totalorder 1, %s22
    %p135 = scmp.lt.s32.totalorder %s22, 3
    %p136 = pnand %p134, %p135
    %p137 = pneg %p136
    // Predicated region
    $region9: #{gcn_pool_block_forward.5} parent=5 // pred_check
      _
    $region10: #{gcn_pool_block_forward.5} parent=5 // pred_check_branch
      %139 = sbr.rel (%p136) target = $region12
    $region11: #{gcn_pool_block_forward.5} parent=5 // pred_region
      %s140 = ssub.s32 %s22, 1
    $region12: #{gcn_pool_block_forward.5} parent=5 // pred_fallthru
      _
    %p141 = scmp.lt.s32.totalorder %s22, 2
    // Predicated region
    $region13: #{gcn_pool_block_forward.5} parent=5 // pred_check
      %p142 = pneg %p141
    $region14: #{gcn_pool_block_forward.5} parent=5 // pred_check_branch
      %144 = sbr.rel (%p142) target = $region16
    $region15: #{gcn_pool_block_forward.5} parent=5 // pred_region
      // Predicated region
      $region17: #{gcn_pool_block_forward.5} parent=15 // pred_check
        %p145 = pneg %p42
      $region18: #{gcn_pool_block_forward.5} parent=15 // pred_check_branch
        %147 = sbr.rel (%p145) target = $region20
      $region19: #{gcn_pool_block_forward.5} parent=15 // pred_region
        %s148 = smul.u32 2, %s22
        %p149 = scmp.lt.s32.totalorder %s148, 3
        %s150 = scalar_select %p149, %s148, 3
        %s151 = smul.addr %s150, 8
        %s152 = scalar_lea.vmem %s2, %s151
        %s153 = smul.u32 2, %s22
      $region20: #{gcn_pool_block_forward.5} parent=15 // pred_fallthru
        _
    $region16: #{gcn_pool_block_forward.5} parent=5 // pred_fallthru
      _
    %p154 = scmp.le.s32.totalorder 1, %s22
    %p155 = scmp.lt.s32.totalorder %s22, 3
    %p156 = pnand %p154, %p155
    %p157 = pneg %p156
    // Predicated region
    $region21: #{gcn_pool_block_forward.5} parent=5 // pred_check
      _
    $region22: #{gcn_pool_block_forward.5} parent=5 // pred_check_branch
      %159 = sbr.rel (%p156) target = $region24
    $region23: #{gcn_pool_block_forward.5} parent=5 // pred_region
      %s160 = ssub.s32 %s22, 1
      %s161 = smul.u32 2, %s27
      %p162 = scmp.lt.s32.totalorder %s161, 3
      %s163 = scalar_select %p162, %s161, 3
      %s164 = smul.addr %s163, 8
      %s165 = scalar_lea.vmem %s2, %s164
      %p166 = pneg %p48
      %p167 = pneg %p45
      %p168 = pneg %p74
      %p169 = pneg %p71
      %p170 = scmp.lt.s32.totalorder %s27, 1
      %s171 = scalar_select %p170, %s27, 1
      %s172 = scalar_lea.vmem %s3, %s171
      %p173 = pneg %p100
      %p174 = pneg %p97
      %p175 = scmp.lt.s32.totalorder %s27, 1
      %s176 = scalar_select %p175, %s27, 1
      %s177 = scalar_lea.vmem %s4, %s176
      %p178 = pneg %p126
      %p179 = pneg %p123
      %p180 = scmp.lt.s32.totalorder %s27, 1
      %s181 = scalar_select %p180, %s27, 1
      %s182 = smul.addr %s181, 8
      %s183 = scalar_lea.vmem %s5, %s182
      %s184 = smul.u32 2, %s27
      %p185 = scmp.lt.s32.totalorder %s184, 3
      %s186 = scalar_select %p185, %s184, 3
      %s187 = smul.addr %s186, 8
      %s188 = scalar_lea.vmem %s2, %s187
      %s189 = smul.u32 2, %s27
      %p190 = scmp.lt.s32.totalorder %s27, 1
      %s191 = scalar_select %p190, %s27, 1
      %s192 = scalar_lea.vmem %s3, %s191
      %p193 = scmp.lt.s32.totalorder %s27, 1
      %s194 = scalar_select %p193, %s27, 1
      %s195 = scalar_lea.vmem %s4, %s194
      %p196 = scmp.lt.s32.totalorder %s27, 1
      %s197 = scalar_select %p196, %s27, 1
      %s198 = smul.addr %s197, 8
      %s199 = scalar_lea.vmem %s5, %s198
      %s200 = smul.u32 %s27, 128
      %s201 = sld [smem:[#allocation3 + %s200]]
      %s202 = scalar_lea.vmem %s188, %s201
      %v203 = vld [vmem:[%s202] sm:$0x1]
      %s204 = sld [smem:[#allocation4 + %s200]]
      %v205 = vstv %s204
      %v206 = vmul.f32 %v203, %v205
      %vm207 = vcmask 253952
      %208 = vst.msk [vmem:[%s199] sm:$0x1] %vm207, %v206
      %s209 = sadd.s32 %s200, 1
      %s210 = sld [smem:[#allocation3 + %s209]]
      %s211 = scalar_lea.vmem %s188, %s210
      %v212 = vld [vmem:[%s211] sm:$0x1]
      %s213 = sld [smem:[#allocation4 + %s209]]
      %v214 = vstv %s213
      %v215 = vmul.f32 %v212, %v214
      %216 = vst.msk [vmem:[%s199 + $0x1] sm:$0x1] %vm207, %v215
      %s217 = sadd.s32 %s200, 2
      %s218 = sld [smem:[#allocation3 + %s217]]
      %s219 = scalar_lea.vmem %s188, %s218
      %v220 = vld [vmem:[%s219] sm:$0x1]
      %s221 = sld [smem:[#allocation4 + %s217]]
      %v222 = vstv %s221
      %v223 = vmul.f32 %v220, %v222
      %224 = vst.msk [vmem:[%s199 + $0x2] sm:$0x1] %vm207, %v223
      %s225 = sadd.s32 %s200, 3
      %s226 = sld [smem:[#allocation3 + %s225]]
      %s227 = scalar_lea.vmem %s188, %s226
      %v228 = vld [vmem:[%s227] sm:$0x1]
      %s229 = sld [smem:[#allocation4 + %s225]]
      %v230 = vstv %s229
      %v231 = vmul.f32 %v228, %v230
      %232 = vst.msk [vmem:[%s199 + $0x3] sm:$0x1] %vm207, %v231
      %s233 = sadd.s32 %s200, 4
      %s234 = sld [smem:[#allocation3 + %s233]]
      %s235 = scalar_lea.vmem %s188, %s234
      %v236 = vld [vmem:[%s235] sm:$0x1]
      %s237 = sld [smem:[#allocation4 + %s233]]
      %v238 = vstv %s237
      %v239 = vmul.f32 %v236, %v238
      %240 = vst.msk [vmem:[%s199 + $0x4] sm:$0x1] %vm207, %v239
      %s241 = sadd.s32 %s200, 5
      %s242 = sld [smem:[#allocation3 + %s241]]
      %s243 = scalar_lea.vmem %s188, %s242
      %v244 = vld [vmem:[%s243] sm:$0x1]
      %s245 = sld [smem:[#allocation4 + %s241]]
      %v246 = vstv %s245
      %v247 = vmul.f32 %v244, %v246
      %248 = vst.msk [vmem:[%s199 + $0x5] sm:$0x1] %vm207, %v247
      %s249 = sadd.s32 %s200, 6
      %s250 = sld [smem:[#allocation3 + %s249]]
      %s251 = scalar_lea.vmem %s188, %s250
      %v252 = vld [vmem:[%s251] sm:$0x1]
      %s253 = sld [smem:[#allocation4 + %s249]]
      %v254 = vstv %s253
      %v255 = vmul.f32 %v252, %v254
      %256 = vst.msk [vmem:[%s199 + $0x6] sm:$0x1] %vm207, %v255
      %s257 = sadd.s32 %s200, 7
      %s258 = sld [smem:[#allocation3 + %s257]]
      %s259 = scalar_lea.vmem %s188, %s258
      %v260 = vld [vmem:[%s259] sm:$0x1]
      %s261 = sld [smem:[#allocation4 + %s257]]
      %v262 = vstv %s261
      %v263 = vmul.f32 %v260, %v262
      %264 = vst.msk [vmem:[%s199 + $0x7] sm:$0x1] %vm207, %v263
      %v265 = vld [vmem:[%s199] sm:$0xff]
      %vm266 = vcmask 261120
      %v267 = vsel %vm266, %v265, -inf
      %v268 = vrot.slane %v267, 4
      %v269 = vmax.f32 %v267, %v268
      %v270 = vrot.slane %v269, 2
      %v271 = vmax.f32 %v269, %v270
      %v272 = vrot.slane %v271, 1
      %v273 = vmax.f32 %v271, %v272
      %274 = vst.msk [vmem:[%s192] sm:$0x1] %vm207, %v273
      %v275 = vsel %vm266, %v265, 0.0
      %v276 = vrot.slane %v275, 4
      %v277 = vadd.f32 %v275, %v276
      %v278 = vrot.slane %v277, 2
      %v279 = vadd.f32 %v277, %v278
      %v280 = vrot.slane %v279, 1
      %v281 = vadd.f32 %v279, %v280
      %v282 = vmul.f32 %v281, 0.125
      %283 = vst.msk [vmem:[%s195] sm:$0x1] %vm207, %v282
      %p284 = scmp.lt.s32.totalorder %s27, 1
      %s285 = scalar_select %p284, %s27, 1
      %s286 = scalar_lea.vmem %s3, %s285
      %p287 = scmp.lt.s32.totalorder %s27, 1
      %s288 = scalar_select %p287, %s27, 1
      %s289 = scalar_lea.vmem %s4, %s288
      %p290 = scmp.lt.s32.totalorder %s27, 1
      %s291 = scalar_select %p290, %s27, 1
      %s292 = smul.addr %s291, 8
      %s293 = scalar_lea.vmem %s5, %s292
      // Predicated region
      $region25: #{gcn_pool_block_forward.5} parent=23 // pred_check
        %p294 = pneg %p71
      $region26: #{gcn_pool_block_forward.5} parent=23 // pred_check_branch
        %296 = sbr.rel (%p294) target = $region28
      $region27: #{gcn_pool_block_forward.5} parent=23 // pred_region
        _
      $region28: #{gcn_pool_block_forward.5} parent=23 // pred_fallthru
        _
      // Predicated region
      $region29: #{gcn_pool_block_forward.5} parent=23 // pred_check
        %p297 = pneg %p97
      $region30: #{gcn_pool_block_forward.5} parent=23 // pred_check_branch
        %299 = sbr.rel (%p297) target = $region32
      $region31: #{gcn_pool_block_forward.5} parent=23 // pred_region
        _
      $region32: #{gcn_pool_block_forward.5} parent=23 // pred_fallthru
        _
      // Predicated region
      $region33: #{gcn_pool_block_forward.5} parent=23 // pred_check
        %p300 = pneg %p123
      $region34: #{gcn_pool_block_forward.5} parent=23 // pred_check_branch
        %302 = sbr.rel (%p300) target = $region36
      $region35: #{gcn_pool_block_forward.5} parent=23 // pred_region
        _
      $region36: #{gcn_pool_block_forward.5} parent=23 // pred_fallthru
        _
    $region24: #{gcn_pool_block_forward.5} parent=5 // pred_fallthru
      _
    %p303 = scmp.le.s32.totalorder 2, %s22
    // Predicated region
    $region37: #{gcn_pool_block_forward.5} parent=5 // pred_check
      %p304 = pneg %p303
    $region38: #{gcn_pool_block_forward.5} parent=5 // pred_check_branch
      %306 = sbr.rel (%p304) target = $region40
    $region39: #{gcn_pool_block_forward.5} parent=5 // pred_region
      %s307 = ssub.s32 %s22, 2
      // Predicated region
      $region41: #{gcn_pool_block_forward.5} parent=39 // pred_check
        %p308 = pneg %p77
      $region42: #{gcn_pool_block_forward.5} parent=39 // pred_check_branch
        %310 = sbr.rel (%p308) target = $region44
      $region43: #{gcn_pool_block_forward.5} parent=39 // pred_region
        %p311 = scmp.lt.s32.totalorder %s28, 1
        %s312 = scalar_select %p311, %s28, 1
        %s313 = scalar_lea.vmem %s3, %s312
      $region44: #{gcn_pool_block_forward.5} parent=39 // pred_fallthru
        _
      // Predicated region
      $region45: #{gcn_pool_block_forward.5} parent=39 // pred_check
        %p314 = pneg %p103
      $region46: #{gcn_pool_block_forward.5} parent=39 // pred_check_branch
        %316 = sbr.rel (%p314) target = $region48
      $region47: #{gcn_pool_block_forward.5} parent=39 // pred_region
        %p317 = scmp.lt.s32.totalorder %s28, 1
        %s318 = scalar_select %p317, %s28, 1
        %s319 = scalar_lea.vmem %s4, %s318
      $region48: #{gcn_pool_block_forward.5} parent=39 // pred_fallthru
        _
      // Predicated region
      $region49: #{gcn_pool_block_forward.5} parent=39 // pred_check
        %p320 = pneg %p129
      $region50: #{gcn_pool_block_forward.5} parent=39 // pred_check_branch
        %322 = sbr.rel (%p320) target = $region52
      $region51: #{gcn_pool_block_forward.5} parent=39 // pred_region
        %p323 = scmp.lt.s32.totalorder %s28, 1
        %s324 = scalar_select %p323, %s28, 1
        %s325 = smul.addr %s324, 8
        %s326 = scalar_lea.vmem %s5, %s325
      $region52: #{gcn_pool_block_forward.5} parent=39 // pred_fallthru
        _
    $region40: #{gcn_pool_block_forward.5} parent=5 // pred_fallthru
      _
  $region6: #{gcn_pool_block_forward.5} parent=0 // loop_footer
    %s26 = sadd.s32 1, %s22
  $region7: #{gcn_pool_block_forward.5} parent=0 // loop_footer_branch
    %21 = sbr.rel target = $region3
  $region8: #{gcn_pool_block_forward.5} parent=0 // loop_exit
    _

// kernel: gcn_pool_block_forward.6
$region0: #{gcn_pool_block_forward.6}
  #allocation0 [shape = 'u32[]', space=smem, size = 0x4, offset = 0x4, fixed_abs, tag = 'smem constant byte address 0x4 - core index']
  #allocation1 [shape = 'u32[144,128]{1,0:T(1,128)}', space=vmem, size = 0x12000, scoped, tag = 'internal scratch']
  %s0 = inlined_call_operand.vmem [shape: s8[2,8,8], index: 0, kind: input, shape index: {}]
  %s1 = inlined_call_operand.vmem [shape: f32[16,32], index: 1, kind: input, shape index: {}]
  %s2 = inlined_call_operand.vmem [shape: f32[1,32], index: 2, kind: input, shape index: {}]
  %s3 = inlined_call_operand.vmem [shape: f32[1,32], index: 3, kind: input, shape index: {}]
  %s4 = inlined_call_operand.vmem [shape: f32[16,1], index: 4, kind: input, shape index: {}]
  %s5 = inlined_call_operand.vmem [shape: f32[16,32], index: 5, kind: output, shape index: {0}]
  %s6 = inlined_call_operand.vmem [shape: f32[2,1,8], index: 6, kind: output, shape index: {1}]
  %7 = xla_tuple %s5, %s6
  %s8 = sld [smem:[#allocation0]]
  $region61: #{gcn_pool_block_forward.6} parent=0
    _
  %s10 = ssub.s32 1, %s8
  %s11 = scalar_select 0, %s10, %s8
  loop: start=0, step=1, limit=4
  $region2: #{gcn_pool_block_forward.6} parent=0 // loop_pre_header
    _
  $region3: #{gcn_pool_block_forward.6} parent=0 // loop_header
    %s13 = sphi 0, %s17
    %p14 = scmp.ge.s32.totalorder %s13, 4
    %s20 = sphi 0, %s32
    %s21 = sphi 0, %s28
    %s22 = sphi 0, %s20
    %s23 = sphi 0, %s21
    %s24 = sphi 0, %s22
    %s25 = sphi 0, %s23
    %s37 = sphi 0, %s39
    %s40 = sphi 0, %s37
    %s41 = sphi 0, %s40
    %s57 = sphi 0, %s41
    %s63 = sphi 0, %s65
    %s66 = sphi 0, %s63
    %s67 = sphi 0, %s66
    %s83 = sphi 0, %s67
    %s87 = sphi 0, %s87
    %s89 = sphi 0, %s87
    %s90 = sphi 0, %s89
    %s104 = sphi 0, %s90
    %s108 = sphi 0, %s108
    %s110 = sphi 0, %s108
    %s111 = sphi 0, %s110
    %s125 = sphi 0, %s111
    %s133 = sphi 0, %s135
    %s136 = sphi 0, %s133
    %s137 = sphi 0, %s136
    %s153 = sphi 0, %s137
    %s161 = sphi 0, %s163
    %s164 = sphi 0, %s161
    %s165 = sphi 0, %s164
    %s181 = sphi 0, %s165
    %s189 = sphi 0, %s191
    %s192 = sphi 0, %s189
    %s193 = sphi 0, %s192
    %s209 = sphi 0, %s193
  $region4: #{gcn_pool_block_forward.6} parent=0 // loop_header_branch
    %16 = sbr.rel (%p14) target = $region8
  $region5: #{gcn_pool_block_forward.6} parent=0 // loop_body
    %s18 = ssub.s32 %s13, 1
    %s19 = ssub.s32 %s13, 2
    %s26 = sadd.s32 1, %s21
    %p27 = scmp.ge.s32.totalorder %s26, 1
    %s28 = scalar_select %p27, 0, %s26
    %s29 = sadd.s32 1, %s20
    %s30 = scalar_select %p27, %s29, %s20
    %p31 = scmp.ge.s32.totalorder %s30, 2
    %s32 = scalar_select %p31, 0, %s30
    %s33 = ssub.s32 %s20, %s32
    %s34 = ssub.s32 %s21, %s28
    %s35 = sor.u32 %s33, %s34
    %p36 = scmp.eq.s32.totalorder %s35, 0
    %s38 = sadd.s32 %s37, 1
    %s39 = scalar_select %p36, %s37, %s38
    %p42 = pneg %p36
    %p43 = scmp.eq.s32.totalorder %s13, 1
    %p44 = por %p42, %p43
    %p45 = scmp.ne.s32.totalorder %s37, %s40
    %p46 = scmp.eq.s32.totalorder %s13, 0
    %p47 = por %p45, %p46
    %p48 = scmp.ne.s32.totalorder %s37, %s40
    %p49 = scmp.eq.s32.totalorder %s18, 1
    %p50 = por %p48, %p49
    %p51 = scmp.ne.s32.totalorder %s40, %s41
    %p52 = scmp.eq.s32.totalorder %s18, 0
    %p53 = por %p51, %p52
    %p54 = scmp.ne.s32.totalorder %s40, %s41
    %p55 = scmp.eq.s32.totalorder %s19, 1
    %p56 = por %p54, %p55
    %p58 = scmp.ne.s32.totalorder %s41, %s57
    %p59 = scmp.eq.s32.totalorder %s19, 0
    %p60 = por %p58, %p59
    %s61 = ssub.s32 %s20, %s32
    %p62 = scmp.eq.s32.totalorder %s61, 0
    %s64 = sadd.s32 %s63, 1
    %s65 = scalar_select %p62, %s63, %s64
    %p68 = pneg %p62
    %p69 = scmp.eq.s32.totalorder %s13, 1
    %p70 = por %p68, %p69
    %p71 = scmp.ne.s32.totalorder %s63, %s66
    %p72 = scmp.eq.s32.totalorder %s13, 0
    %p73 = por %p71, %p72
    %p74 = scmp.ne.s32.totalorder %s63, %s66
    %p75 = scmp.eq.s32.totalorder %s18, 1
    %p76 = por %p74, %p75
    %p77 = scmp.ne.s32.totalorder %s66, %s67
    %p78 = scmp.eq.s32.totalorder %s18, 0
    %p79 = por %p77, %p78
    %p80 = scmp.ne.s32.totalorder %s66, %s67
    %p81 = scmp.eq.s32.totalorder %s19, 1
    %p82 = por %p80, %p81
    %p84 = scmp.ne.s32.totalorder %s67, %s83
    %p85 = scmp.eq.s32.totalorder %s19, 0
    %p86 = por %p84, %p85
    %s88 = sadd.s32 %s87, 1
    %p91 = scmp.eq.s32.totalorder %s13, 1
    %p92 = scmp.ne.s32.totalorder %s87, %s89
    %p93 = scmp.eq.s32.totalorder %s13, 0
    %p94 = por %p92, %p93
    %p95 = scmp.ne.s32.totalorder %s87, %s89
    %p96 = scmp.eq.s32.totalorder %s18, 1
    %p97 = por %p95, %p96
    %p98 = scmp.ne.s32.totalorder %s89, %s90
    %p99 = scmp.eq.s32.totalorder %s18, 0
    %p100 = por %p98, %p99
    %p101 = scmp.ne.s32.totalorder %s89, %s90
    %p102 = scmp.eq.s32.totalorder %s19, 1
    %p103 = por %p101, %p102
    %p105 = scmp.ne.s32.totalorder %s90, %s104
    %p106 = scmp.eq.s32.totalorder %s19, 0
    %p107 = por %p105, %p106
    %s109 = sadd.s32 %s108, 1
    %p112 = scmp.eq.s32.totalorder %s13, 1
    %p113 = scmp.ne.s32.totalorder %s108, %s110
    %p114 = scmp.eq.s32.totalorder %s13, 0
    %p115 = por %p113, %p114
    %p116 = scmp.ne.s32.totalorder %s108, %s110
    %p117 = scmp.eq.s32.totalorder %s18, 1
    %p118 = por %p116, %p117
    %p119 = scmp.ne.s32.totalorder %s110, %s111
    %p120 = scmp.eq.s32.totalorder %s18, 0
    %p121 = por %p119, %p120
    %p122 = scmp.ne.s32.totalorder %s110, %s111
    %p123 = scmp.eq.s32.totalorder %s19, 1
    %p124 = por %p122, %p123
    %p126 = scmp.ne.s32.totalorder %s111, %s125
    %p127 = scmp.eq.s32.totalorder %s19, 0
    %p128 = por %p126, %p127
    %s129 = sadd.s32 %s20, %s21
    %s130 = sadd.s32 %s32, %s28
    %s131 = ssub.s32 %s129, %s130
    %p132 = scmp.eq.s32.totalorder %s131, 0
    %s134 = sadd.s32 %s133, 1
    %s135 = scalar_select %p132, %s133, %s134
    %p138 = pneg %p132
    %p139 = scmp.eq.s32.totalorder %s13, 1
    %p140 = por %p138, %p139
    %p141 = scmp.ne.s32.totalorder %s133, %s136
    %p142 = scmp.eq.s32.totalorder %s13, 0
    %p143 = por %p141, %p142
    %p144 = scmp.ne.s32.totalorder %s133, %s136
    %p145 = scmp.eq.s32.totalorder %s18, 1
    %p146 = por %p144, %p145
    %p147 = scmp.ne.s32.totalorder %s136, %s137
    %p148 = scmp.eq.s32.totalorder %s18, 0
    %p149 = por %p147, %p148
    %p150 = scmp.ne.s32.totalorder %s136, %s137
    %p151 = scmp.eq.s32.totalorder %s19, 1
    %p152 = por %p150, %p151
    %p154 = scmp.ne.s32.totalorder %s137, %s153
    %p155 = scmp.eq.s32.totalorder %s19, 0
    %p156 = por %p154, %p155
    %s157 = sadd.s32 %s20, %s21
    %s158 = sadd.s32 %s32, %s28
    %s159 = ssub.s32 %s157, %s158
    %p160 = scmp.eq.s32.totalorder %s159, 0
    %s162 = sadd.s32 %s161, 1
    %s163 = scalar_select %p160, %s161, %s162
    %p166 = pneg %p160
    %p167 = scmp.eq.s32.totalorder %s13, 1
    %p168 = por %p166, %p167
    %p169 = scmp.ne.s32.totalorder %s161, %s164
    %p170 = scmp.eq.s32.totalorder %s13, 0
    %p171 = por %p169, %p170
    %p172 = scmp.ne.s32.totalorder %s161, %s164
    %p173 = scmp.eq.s32.totalorder %s18, 1
    %p174 = por %p172, %p173
    %p175 = scmp.ne.s32.totalorder %s164, %s165
    %p176 = scmp.eq.s32.totalorder %s18, 0
    %p177 = por %p175, %p176
    %p178 = scmp.ne.s32.totalorder %s164, %s165
    %p179 = scmp.eq.s32.totalorder %s19, 1
    %p180 = por %p178, %p179
    %p182 = scmp.ne.s32.totalorder %s165, %s181
    %p183 = scmp.eq.s32.totalorder %s19, 0
    %p184 = por %p182, %p183
    %s185 = ssub.s32 %s20, %s32
    %s186 = ssub.s32 %s21, %s28
    %s187 = sor.u32 %s185, %s186
    %p188 = scmp.eq.s32.totalorder %s187, 0
    %s190 = sadd.s32 %s189, 1
    %s191 = scalar_select %p188, %s189, %s190
    %p194 = pneg %p188
    %p195 = scmp.eq.s32.totalorder %s13, 1
    %p196 = por %p194, %p195
    %p197 = scmp.ne.s32.totalorder %s189, %s192
    %p198 = scmp.eq.s32.totalorder %s13, 0
    %p199 = por %p197, %p198
    %p200 = scmp.ne.s32.totalorder %s189, %s192
    %p201 = scmp.eq.s32.totalorder %s18, 1
    %p202 = por %p200, %p201
    %p203 = scmp.ne.s32.totalorder %s192, %s193
    %p204 = scmp.eq.s32.totalorder %s18, 0
    %p205 = por %p203, %p204
    %p206 = scmp.ne.s32.totalorder %s192, %s193
    %p207 = scmp.eq.s32.totalorder %s19, 1
    %p208 = por %p206, %p207
    %p210 = scmp.ne.s32.totalorder %s193, %s209
    %p211 = scmp.eq.s32.totalorder %s19, 0
    %p212 = por %p210, %p211
    %p213 = scmp.le.s32.totalorder 1, %s13
    %p214 = scmp.lt.s32.totalorder %s13, 3
    %p215 = pnand %p213, %p214
    %p216 = pneg %p215
    // Predicated region
    $region9: #{gcn_pool_block_forward.6} parent=5 // pred_check
      _
    $region10: #{gcn_pool_block_forward.6} parent=5 // pred_check_branch
      %218 = sbr.rel (%p215) target = $region12
    $region11: #{gcn_pool_block_forward.6} parent=5 // pred_region
      %s219 = ssub.s32 %s13, 1
      // Predicated region
      $region13: #{gcn_pool_block_forward.6} parent=11 // pred_check
        %p220 = pneg %p100
      $region14: #{gcn_pool_block_forward.6} parent=11 // pred_check_branch
        %222 = sbr.rel (%p220) target = $region16
      $region15: #{gcn_pool_block_forward.6} parent=11 // pred_region
        _
      $region16: #{gcn_pool_block_forward.6} parent=11 // pred_fallthru
        _
      // Predicated region
      $region17: #{gcn_pool_block_forward.6} parent=11 // pred_check
        %p223 = pneg %p121
      $region18: #{gcn_pool_block_forward.6} parent=11 // pred_check_branch
        %225 = sbr.rel (%p223) target = $region20
      $region19: #{gcn_pool_block_forward.6} parent=11 // pred_region
        _
      $region20: #{gcn_pool_block_forward.6} parent=11 // pred_fallthru
        _
    $region12: #{gcn_pool_block_forward.6} parent=5 // pred_fallthru
      _
    %p226 = scmp.lt.s32.totalorder %s13, 2
    // Predicated region
    $region21: #{gcn_pool_block_forward.6} parent=5 // pred_check
      %p227 = pneg %p226
    $region22: #{gcn_pool_block_forward.6} parent=5 // pred_check_branch
      %229 = sbr.rel (%p227) target = $region24
    $region23: #{gcn_pool_block_forward.6} parent=5 // pred_region
      // Predicated region
      $region25: #{gcn_pool_block_forward.6} parent=23 // pred_check
        %p230 = pneg %p47
      $region26: #{gcn_pool_block_forward.6} parent=23 // pred_check_branch
        %232 = sbr.rel (%p230) target = $region28
      $region27: #{gcn_pool_block_forward.6} parent=23 // pred_region
        %p233 = scmp.lt.s32.totalorder %s20, 1
        %s234 = scalar_select %p233, %s20, 1
        %p235 = scmp.lt.s32.totalorder %s21, 0
        %s236 = scalar_select %p235, %s21, 0
        %s237 = sadd.s32 %s236, %s234
        %s238 = smul.addr %s237, 2
        %s239 = scalar_lea.vmem %s0, %s238
      $region28: #{gcn_pool_block_forward.6} parent=23 // pred_fallthru
        _
      // Predicated region
      $region29: #{gcn_pool_block_forward.6} parent=23 // pred_check
        %p240 = pneg %p73
      $region30: #{gcn_pool_block_forward.6} parent=23 // pred_check_branch
        %242 = sbr.rel (%p240) target = $region32
      $region31: #{gcn_pool_block_forward.6} parent=23 // pred_region
        %p243 = scmp.lt.s32.totalorder %s20, 1
        %s244 = scalar_select %p243, %s20, 1
        %s245 = smul.addr %s244, 8
        %s246 = scalar_lea.vmem %s1, %s245
      $region32: #{gcn_pool_block_forward.6} parent=23 // pred_fallthru
        _
      // Predicated region
      $region33: #{gcn_pool_block_forward.6} parent=23 // pred_check
        %p247 = pneg %p143
      $region34: #{gcn_pool_block_forward.6} parent=23 // pred_check_branch
        %249 = sbr.rel (%p247) target = $region36
      $region35: #{gcn_pool_block_forward.6} parent=23 // pred_region
        %s250 = sadd.s32 %s20, %s21
        %p251 = scmp.lt.s32.totalorder %s250, 1
        %s252 = scalar_select %p251, %s250, 1
        %s253 = smul.addr %s252, 8
        %s254 = scalar_lea.vmem %s4, %s253
        %s255 = sadd.s32 %s20, %s21
      $region36: #{gcn_pool_block_forward.6} parent=23 // pred_fallthru
        _
    $region24: #{gcn_pool_block_forward.6} parent=5 // pred_fallthru
      _
    %p256 = scmp.le.s32.totalorder 1, %s13
    %p257 = scmp.lt.s32.totalorder %s13, 3
    %p258 = pnand %p256, %p257
    %p259 = pneg %p258
    // Predicated region
    $region37: #{gcn_pool_block_forward.6} parent=5 // pred_check
      _
    $region38: #{gcn_pool_block_forward.6} parent=5 // pred_check_branch
      %261 = sbr.rel (%p258) target = $region40
    $region39: #{gcn_pool_block_forward.6} parent=5 // pred_region
      %s262 = ssub.s32 %s13, 1
      %p263 = scmp.lt.s32.totalorder %s22, 1
      %s264 = scalar_select %p263, %s22, 1
      %p265 = scmp.lt.s32.totalorder %s23, 0
      %s266 = scalar_select %p265, %s23, 0
      %s267 = sadd.s32 %s266, %s264
      %s268 = smul.addr %s267, 2
      %s269 = scalar_lea.vmem %s0, %s268
      %p270 = pneg %p53
      %p271 = pneg %p50
      %p272 = scmp.lt.s32.totalorder %s22, 1
      %s273 = scalar_select %p272, %s22, 1
      %s274 = smul.addr %s273, 8
      %s275 = scalar_lea.vmem %s1, %s274
      %p276 = pneg %p79
      %p277 = pneg %p76
      %p278 = pneg %p100
      %p279 = pneg %p97
      %p280 = pneg %p121
      %p281 = pneg %p118
      %s282 = sadd.s32 %s22, %s23
      %p283 = scmp.lt.s32.totalorder %s282, 1
      %s284 = scalar_select %p283, %s282, 1
      %s285 = smul.addr %s284, 8
      %s286 = scalar_lea.vmem %s4, %s285
      %p287 = pneg %p149
      %p288 = pneg %p146
      %p289 = pneg %p177
      %p290 = pneg %p174
      %s291 = sadd.s32 %s22, %s23
      %p292 = scmp.lt.s32.totalorder %s291, 1
      %s293 = scalar_select %p292, %s291, 1
      %s294 = smul.addr %s293, 8
      %s295 = scalar_lea.vmem %s5, %s294
      %p296 = pneg %p205
      %p297 = pneg %p202
      %p298 = scmp.lt.s32.totalorder %s22, 1
      %s299 = scalar_select %p298, %s22, 1
      %p300 = scmp.lt.s32.totalorder %s23, 0
      %s301 = scalar_select %p300, %s23, 0
      %s302 = sadd.s32 %s301, %s299
      %s303 = scalar_lea.vmem %s6, %s302
      %p304 = scmp.lt.s32.totalorder %s22, 1
      %s305 = scalar_select %p304, %s22, 1
      %p306 = scmp.lt.s32.totalorder %s23, 0
      %s307 = scalar_select %p306, %s23, 0
      %s308 = sadd.s32 %s307, %s305
      %s309 = smul.addr %s308, 2
      %s310 = scalar_lea.vmem %s0, %s309
      %p311 = scmp.lt.s32.totalorder %s22, 1
      %s312 = scalar_select %p311, %s22, 1
      %s313 = smul.addr %s312, 8
      %s314 = scalar_lea.vmem %s1, %s313
      %s315 = sadd.s32 %s22, %s23
      %p316 = scmp.lt.s32.totalorder %s315, 1
      %s317 = scalar_select %p316, %s315, 1
      %s318 = smul.addr %s317, 8
      %s319 = scalar_lea.vmem %s4, %s318
      %s320 = sadd.s32 %s22, %s23
      %s321 = sadd.s32 %s22, %s23
      %p322 = scmp.lt.s32.totalorder %s321, 1
      %s323 = scalar_select %p322, %s321, 1
      %s324 = smul.addr %s323, 8
      %s325 = scalar_lea.vmem %s5, %s324
      %s326 = sadd.s32 %s22, %s23
      %p327 = scmp.lt.s32.totalorder %s22, 1
      %s328 = scalar_select %p327, %s22, 1
      %p329 = scmp.lt.s32.totalorder %s23, 0
      %s330 = scalar_select %p329, %s23, 0
      %s331 = sadd.s32 %s330, %s328
      %s332 = scalar_lea.vmem %s6, %s331
      %s333 = smul.u32 %s23, 8
      %v334 = vld [vmem:[%s310] sm:$0x3]
      %v335 = vunpack.c.0.s8 %v334
      %v336 = vcvt.s32.f32 %v335
      %v337 = vld [vmem:[%s314] sm:$0xff]
      %s338 = scalar_lea.vmem %s314, %s333
      %v339 = vld [vmem:[%s338] sm:$0xff]
      %v340 = vld [vmem:[%s319] sm:$0xff]
      %vm341 = vcmask 64512
      %v343 = vsel %vm341, %v336, 0
      %345 = vmatprep.subr.mxu0 0.0
      %346 = vmatpush1.msra.mxu0 %v337
      %347 = vmatprep.subr.mxu0 0.0
      %348 = vmatpush1.msra.mxu0 0.0
      %349 = vmatprep.subr.mxu0 0.0
      %350 = vmatpush1.msra.mxu0 0.0
      %351 = vmatprep.subr.mxu0 0.0
      %352 = vmatpush1.msra.mxu0 0.0
      %353 = vmatprep.subr.mxu0 0.0
      %354 = vmatpush1.msra.mxu0 0.0
      %355 = vmatprep.subr.mxu0 0.0
      %356 = vmatpush1.msra.mxu0 0.0
      %357 = vmatprep.subr.mxu0 0.0
      %358 = vmatpush1.msra.mxu0 0.0
      %359 = vmatprep.subr.mxu0 0.0
      %360 = vmatpush1.msra.mxu0 0.0
      %361 = vmatprep.subr.mxu0 0.0
      %362 = vmatpush1.msra.mxu0 0.0
      %363 = vmatprep.subr.mxu0 0.0
      %364 = vmatpush1.msra.mxu0 0.0
      %365 = vmatprep.subr.mxu0 0.0
      %366 = vmatpush1.msra.mxu0 0.0
      %367 = vmatprep.subr.mxu0 0.0
      %368 = vmatpush1.msra.mxu0 0.0
      %369 = vmatprep.subr.mxu0 0.0
      %370 = vmatpush1.msra.mxu0 0.0
      %371 = vmatprep.subr.mxu0 0.0
      %372 = vmatpush1.msra.mxu0 0.0
      %373 = vmatprep.subr.mxu0 0.0
      %374 = vmatpush1.msra.mxu0 0.0
      %375 = vmatprep.subr.mxu0 0.0
      %376 = vmatpush1.msra.mxu0 0.0
      %377 = vmatprep.subr.mxu0 0.0
      %378 = vmatpush1.msra.mxu0 0.0
      %379 = vmatprep.subr.mxu0 0.0
      %380 = vmatpush1.msra.mxu0 0.0
      %381 = vmatprep.subr.mxu0 0.0
      %382 = vmatpush1.msra.mxu0 0.0
      %383 = vmatprep.subr.mxu0 0.0
      %384 = vmatpush1.msra.mxu0 0.0
      %385 = vmatprep.subr.mxu0 0.0
      %386 = vmatpush1.msra.mxu0 0.0
      %387 = vmatprep.subr.mxu0 0.0
      %388 = vmatpush1.msra.mxu0 0.0
      %389 = vmatprep.subr.mxu0 0.0
      %390 = vmatpush1.msra.mxu0 0.0
      %391 = vmatprep.subr.mxu0 0.0
      %392 = vmatpush1.msra.mxu0 0.0
      %393 = vmatprep.subr.mxu0 0.0
      %394 = vmatpush1.msra.mxu0 0.0
      %395 = vmatprep.subr.mxu0 0.0
      %396 = vmatpush1.msra.mxu0 0.0
      %397 = vmatprep.subr.mxu0 0.0
      %398 = vmatpush1.msra.mxu0 0.0
      %399 = vmatprep.subr.mxu0 0.0
      %400 = vmatpush1.msra.mxu0 0.0
      %401 = vmatprep.subr.mxu0 0.0
      %402 = vmatpush1.msra.mxu0 0.0
      %403 = vmatprep.subr.mxu0 0.0
      %404 = vmatpush1.msra.mxu0 0.0
      %405 = vmatprep.subr.mxu0 0.0
      %406 = vmatpush1.msra.mxu0 0.0
      %407 = vmatprep.subr.mxu0 0.0
      %408 = vmatpush1.msra.mxu0 0.0
      %409 = vmatprep.mubr.f32.mxu0 0.0
      %410 = vmatmul.mubr.f32.gmra.mrb[0].mxu0 %v343
      %v411 = vpop.f32.mrb[0].mxu0
      %v412 = vadd.f32 %v339, %v411
      %v413 = vpop.f32.mrb[0].mxu0
      %414 = vdwg.mxu0
      %416 = vset.pattern.permute.xlu0 0
      %417 = vperm.xlu0 %416, %v340
      %v418 = vpop.permute.xlu0 %417
      %v420 = vmul.f32 %v418, %v412
      %v421 = vld [vmem:[%s2] sm:$0x1]
      %v423 = vlaneseq
      %v424 = vshrl.u32 %v423, 7
      %v425 = vsub.s32 0, %v424
      %v426 = vrot.slane %v421, %v425
      %v428 = vadd.f32 %v420, %v426
      %v429 = vmax.f32 %v428, 0.0
      %vm430 = vcmask 261120
      %431 = vst.msk [vmem:[%s325] sm:$0xff] %vm430, %v429
      %v432 = vld [vmem:[%s3] sm:$0x1]
      %v434 = vlaneseq
      %v435 = vshrl.u32 %v434, 7
      %v436 = vsub.s32 0, %v435
      %v437 = vrot.slane %v432, %v436
      %v439 = vmul.f32 %v429, %v437
      %v440 = vsel %vm430, %v439, 0.0
      %441 = vadd.xlane.f32.xlu0 %v440
      %v442 = vpop.xlane.xlu0 %441
      %v443 = vtanh.pop %v442
      %v445 = vlaneseq
      %v446 = vand.u32 %v445, 127
      %v447 = vlaneseq
      %v448 = vshrl.u32 %v447, 7
      %v449 = vsub.s32 %v446, %v448
      %v450 = vrot.slane %v443, %v449
      %vm452 = vcmask 57344
      %453 = vst.msk [vmem:[%s332] sm:$0x1] %vm452, %v450
      %s454 = sadd.s32 %s22, %s23
      %p455 = scmp.lt.s32.totalorder %s454, 1
      %s456 = scalar_select %p455, %s454, 1
      %s457 = smul.addr %s456, 8
      %s458 = scalar_lea.vmem %s5, %s457
      %p459 = scmp.lt.s32.totalorder %s22, 1
      %s460 = scalar_select %p459, %s22, 1
      %p461 = scmp.lt.s32.totalorder %s23, 0
      %s462 = scalar_select %p461, %s23, 0
      %s463 = sadd.s32 %s462, %s460
      %s464 = scalar_lea.vmem %s6, %s463
      // Predicated region
      $region41: #{gcn_pool_block_forward.6} parent=39 // pred_check
        %p465 = pneg %p174
      $region42: #{gcn_pool_block_forward.6} parent=39 // pred_check_branch
        %467 = sbr.rel (%p465) target = $region44
      $region43: #{gcn_pool_block_forward.6} parent=39 // pred_region
        %s468 = sadd.s32 %s22, %s23
      $region44: #{gcn_pool_block_forward.6} parent=39 // pred_fallthru
        _
      // Predicated region
      $region45: #{gcn_pool_block_forward.6} parent=39 // pred_check
        %p469 = pneg %p202
      $region46: #{gcn_pool_block_forward.6} parent=39 // pred_check_branch
        %471 = sbr.rel (%p469) target = $region48
      $region47: #{gcn_pool_block_forward.6} parent=39 // pred_region
        _
      $region48: #{gcn_pool_block_forward.6} parent=39 // pred_fallthru
        _
    $region40: #{gcn_pool_block_forward.6} parent=5 // pred_fallthru
      _
    %p472 = scmp.le.s32.totalorder 2, %s13
    // Predicated region
    $region49: #{gcn_pool_block_forward.6} parent=5 // pred_check
      %p473 = pneg %p472
    $region50: #{gcn_pool_block_forward.6} parent=5 // pred_check_branch
      %475 = sbr.rel (%p473) target = $region52
    $region51: #{gcn_pool_block_forward.6} parent=5 // pred_region
      %s476 = ssub.s32 %s13, 2
      // Predicated region
      $region53: #{gcn_pool_block_forward.6} parent=51 // pred_check
        %p477 = pneg %p180
      $region54: #{gcn_pool_block_forward.6} parent=51 // pred_check_branch
        %479 = sbr.rel (%p477) target = $region56
      $region55: #{gcn_pool_block_forward.6} parent=51 // pred_region
        %s480 = sadd.s32 %s24, %s25
        %p481 = scmp.lt.s32.totalorder %s480, 1
        %s482 = scalar_select %p481, %s480, 1
        %s483 = smul.addr %s482, 8
        %s484 = scalar_lea.vmem %s5, %s483
      $region56: #{gcn_pool_block_forward.6} parent=51 // pred_fallthru
        _
      // Predicated region
      $region57: #{gcn_pool_block_forward.6} parent=51 // pred_check
        %p485 = pneg %p208
      $region58: #{gcn_pool_block_forward.6} parent=51 // pred_check_branch
        %487 = sbr.rel (%p485) target = $region60
      $region59: #{gcn_pool_block_forward.6} parent=51 // pred_region
        %p488 = scmp.lt.s32.totalorder %s24, 1
        %s489 = scalar_select %p488, %s24, 1
        %p490 = scmp.lt.s32.totalorder %s25, 0
        %s491 = scalar_select %p490, %s25, 0
        %s492 = sadd.s32 %s491, %s489
        %s493 = scalar_lea.vmem %s6, %s492
      $region60: #{gcn_pool_block_forward.6} parent=51 // pred_fallthru
        _
    $region52: #{gcn_pool_block_forward.6} parent=5 // pred_fallthru
      _
  $region6: #{gcn_pool_block_forward.6} parent=0 // loop_footer
    %s17 = sadd.s32 1, %s13
  $region7: #{gcn_pool_block_forward.6} parent=0 // loop_footer_branch
    %12 = sbr.rel target = $region3
  $region8: #{gcn_pool_block_forward.6} parent=0 // loop_exit
    _

// kernel: gcn_pool_block_forward.7
$region0: #{gcn_pool_block_forward.7}
  #allocation0 [shape = 'u32[]', space=smem, size = 0x4, offset = 0x4, fixed_abs, tag = 'smem constant byte address 0x4 - core index']
  #allocation1 [shape = 'u32[144,128]{1,0:T(1,128)}', space=vmem, size = 0x12000, scoped, tag = 'internal scratch']
  #allocation2 [shape = 's32[1]{0}', space=sflag, size = 0x4, scoped, tag = 'scoped memory for gcn_pool_block_forward.7']
  #allocation3 [shape = 'u8[1024]{0}', space=smem, size = 0x400, scoped, tag = 'prefetched SMEM operand 0']
  #allocation4 [shape = 'u8[1024]{0}', space=smem, size = 0x400, scoped, tag = 'prefetched SMEM operand 1']
  %s0 = inlined_call_operand.vmem [shape: s32[2,4], index: 0, kind: input, shape index: {}]
  %s1 = inlined_call_operand.vmem [shape: f32[2,4], index: 1, kind: input, shape index: {}]
  %s2 = inlined_call_operand.vmem [shape: f32[16,32], index: 2, kind: input, shape index: {}]
  %s3 = inlined_call_operand.vmem [shape: f32[2,1,32], index: 3, kind: output, shape index: {0}]
  %s4 = inlined_call_operand.vmem [shape: f32[2,1,32], index: 4, kind: output, shape index: {1}]
  %s5 = inlined_call_operand.hbm [shape: f32[2,4,32], index: 5, kind: output, shape index: {2}]
  %6 = xla_tuple %s3, %s4, %s5
  %s7 = sld [smem:[#allocation0]]
  $region53: #{gcn_pool_block_forward.7} parent=0
    _
  %s9 = ssub.s32 1, %s7
  %s10 = scalar_select 0, %s9, %s7
  %s11 = sshll.u32 %s0, 4
  %s12 = int_to_ptr.vmem [resolvable:$true] %s11
  %14 = dma.vmem_to_smem %s12, 32, [#allocation3], [#allocation2]
  %s15 = sshll.u32 %s1, 4
  %s16 = int_to_ptr.vmem [resolvable:$true] %s15
  %18 = dma.vmem_to_smem %s16, 32, [#allocation4], [#allocation2]
  %19 = dma.done [#allocation2], 64
  %20 = sfence
  $region1: #{gcn_pool_block_forward.7} parent=0
    #allocation5 [shape = 'u8[4096]{0}', space=vmem, size = 0x1000, scoped, tag = 'output window, operand 2']
    #allocation6 [shape = 's32[2]{0}', space=sflag, size = 0x8, scoped, tag = 'scoped memory for gcn_pool_block_forward.7']
    %21 = vsyncpa [#allocation6], 0
    %s22 = scalar_lea.sflag [#allocation6], 1
    %23 = vsyncpa %s22, 0
    loop: start=0, step=1, limit=4
    $region2: #{gcn_pool_block_forward.7} parent=1 // loop_pre_header
      _
    $region3: #{gcn_pool_block_forward.7} parent=1 // loop_header
      %s25 = sphi 0, %s29
      %p26 = scmp.ge.s32.totalorder %s25, 4
      %s35 = sphi 0, %s37
      %s38 = sphi 0, %s35
      %s39 = sphi 0, %s38
      %s55 = sphi 0, %s39
      %s61 = sphi 0, %s63
      %s64 = sphi 0, %s61
      %s65 = sphi 0, %s64
      %s81 = sphi 0, %s65
      %s87 = sphi 0, %s89
      %s90 = sphi 0, %s87
      %s91 = sphi 0, %s90
      %s107 = sphi 0, %s91
      %s113 = sphi 0, %s115
      %s116 = sphi 0, %s113
      %s117 = sphi 0, %s116
      %s133 = sphi 0, %s117
    $region4: #{gcn_pool_block_forward.7} parent=1 // loop_header_branch
      %28 = sbr.rel (%p26) target = $region8
    $region5: #{gcn_pool_block_forward.7} parent=1 // loop_body
      %s30 = ssub.s32 %s25, 1
      %s31 = ssub.s32 %s25, 2
      %s32 = sadd.s32 %s25, 1
      %s33 = ssub.s32 %s25, %s32
      %p34 = scmp.eq.s32.totalorder %s33, 0
      %s36 = sadd.s32 %s35, 1
      %s37 = scalar_select %p34, %s35, %s36
      %p40 = pneg %p34
      %p41 = scmp.eq.s32.totalorder %s25, 1
      %p42 = por %p40, %p41
      %p43 = scmp.ne.s32.totalorder %s35, %s38
      %p44 = scmp.eq.s32.totalorder %s25, 0
      %p45 = por %p43, %p44
      %p46 = scmp.ne.s32.totalorder %s35, %s38
      %p47 = scmp.eq.s32.totalorder %s30, 1
      %p48 = por %p46, %p47
      %p49 = scmp.ne.s32.totalorder %s38, %s39
      %p50 = scmp.eq.s32.totalorder %s30, 0
      %p51 = por %p49, %p50
      %p52 = scmp.ne.s32.totalorder %s38, %s39
      %p53 = scmp.eq.s32.totalorder %s31, 1
      %p54 = por %p52, %p53
      %p56 = scmp.ne.s32.totalorder %s39, %s55
      %p57 = scmp.eq.s32.totalorder %s31, 0
      %p58 = por %p56, %p57
      %s59 = ssub.s32 %s25, %s32
      %p60 = scmp.eq.s32.totalorder %s59, 0
      %s62 = sadd.s32 %s61, 1
      %s63 = scalar_select %p60, %s61, %s62
      %p66 = pneg %p60
      %p67 = scmp.eq.s32.totalorder %s25, 1
      %p68 = por %p66, %p67
      %p69 = scmp.ne.s32.totalorder %s61, %s64
      %p70 = scmp.eq.s32.totalorder %s25, 0
      %p71 = por %p69, %p70
      %p72 = scmp.ne.s32.totalorder %s61, %s64
      %p73 = scmp.eq.s32.totalorder %s30, 1
      %p74 = por %p72, %p73
      %p75 = scmp.ne.s32.totalorder %s64, %s65
      %p76 = scmp.eq.s32.totalorder %s30, 0
      %p77 = por %p75, %p76
      %p78 = scmp.ne.s32.totalorder %s64, %s65
      %p79 = scmp.eq.s32.totalorder %s31, 1
      %p80 = por %p78, %p79
      %p82 = scmp.ne.s32.totalorder %s65, %s81
      %p83 = scmp.eq.s32.totalorder %s31, 0
      %p84 = por %p82, %p83
      %s85 = ssub.s32 %s25, %s32
      %p86 = scmp.eq.s32.totalorder %s85, 0
      %s88 = sadd.s32 %s87, 1
      %s89 = scalar_select %p86, %s87, %s88
      %p92 = pneg %p86
      %p93 = scmp.eq.s32.totalorder %s25, 1
      %p94 = por %p92, %p93
      %p95 = scmp.ne.s32.totalorder %s87, %s90
      %p96 = scmp.eq.s32.totalorder %s25, 0
      %p97 = por %p95, %p96
      %p98 = scmp.ne.s32.totalorder %s87, %s90
      %p99 = scmp.eq.s32.totalorder %s30, 1
      %p100 = por %p98, %p99
      %p101 = scmp.ne.s32.totalorder %s90, %s91
      %p102 = scmp.eq.s32.totalorder %s30, 0
      %p103 = por %p101, %p102
      %p104 = scmp.ne.s32.totalorder %s90, %s91
      %p105 = scmp.eq.s32.totalorder %s31, 1
      %p106 = por %p104, %p105
      %p108 = scmp.ne.s32.totalorder %s91, %s107
      %p109 = scmp.eq.s32.totalorder %s31, 0
      %p110 = por %p108, %p109
      %s111 = ssub.s32 %s25, %s32
      %p112 = scmp.eq.s32.totalorder %s111, 0
      %s114 = sadd.s32 %s113, 1
      %s115 = scalar_select %p112, %s113, %s114
      %p118 = pneg %p112
      %p119 = scmp.eq.s32.totalorder %s25, 1
      %p120 = por %p118, %p119
      %p121 = scmp.ne.s32.totalorder %s113, %s116
      %p122 = scmp.eq.s32.totalorder %s25, 0
      %p123 = por %p121, %p122
      %p124 = scmp.ne.s32.totalorder %s113, %s116
      %p125 = scmp.eq.s32.totalorder %s30, 1
      %p126 = por %p124, %p125
      %p127 = scmp.ne.s32.totalorder %s116, %s117
      %p128 = scmp.eq.s32.totalorder %s30, 0
      %p129 = por %p127, %p128
      %p130 = scmp.ne.s32.totalorder %s116, %s117
      %p131 = scmp.eq.s32.totalorder %s31, 1
      %p132 = por %p130, %p131
      %p134 = scmp.ne.s32.totalorder %s117, %s133
      %p135 = scmp.eq.s32.totalorder %s31, 0
      %p136 = por %p134, %p135
      %p137 = scmp.le.s32.totalorder 1, %s25
      %p138 = scmp.lt.s32.totalorder %s25, 3
      %p139 = pnand %p137, %p138
      %p140 = pneg %p139
      // Predicated region
      $region9: #{gcn_pool_block_forward.7} parent=5 // pred_check
        _
      $region10: #{gcn_pool_block_forward.7} parent=5 // pred_check_branch
        %142 = sbr.rel (%p139) target = $region12
      $region11: #{gcn_pool_block_forward.7} parent=5 // pred_region
        %s143 = ssub.s32 %s25, 1
      $region12: #{gcn_pool_block_forward.7} parent=5 // pred_fallthru
        _
      %p144 = scmp.lt.s32.totalorder %s25, 2
      // Predicated region
      $region13: #{gcn_pool_block_forward.7} parent=5 // pred_check
        %p145 = pneg %p144
      $region14: #{gcn_pool_block_forward.7} parent=5 // pred_check_branch
        %147 = sbr.rel (%p145) target = $region16
      $region15: #{gcn_pool_block_forward.7} parent=5 // pred_region
        // Predicated region
        $region17: #{gcn_pool_block_forward.7} parent=15 // pred_check
          %p148 = pneg %p45
        $region18: #{gcn_pool_block_forward.7} parent=15 // pred_check_branch
          %150 = sbr.rel (%p148) target = $region20
        $region19: #{gcn_pool_block_forward.7} parent=15 // pred_region
          %p151 = scmp.lt.s32.totalorder %s25, 1
          %s152 = scalar_select %p151, %s25, 1
          %s153 = smul.addr %s152, 8
          %s154 = scalar_lea.vmem %s2, %s153
        $region20: #{gcn_pool_block_forward.7} parent=15 // pred_fallthru
          _
      $region16: #{gcn_pool_block_forward.7} parent=5 // pred_fallthru
        _
      %p155 = scmp.le.s32.totalorder 1, %s25
      %p156 = scmp.lt.s32.totalorder %s25, 3
      %p157 = pnand %p155, %p156
      %p158 = pneg %p157
      // Predicated region
      $region21: #{gcn_pool_block_forward.7} parent=5 // pred_check
        _
      $region22: #{gcn_pool_block_forward.7} parent=5 // pred_check_branch
        %160 = sbr.rel (%p157) target = $region24
      $region23: #{gcn_pool_block_forward.7} parent=5 // pred_region
        %s161 = ssub.s32 %s25, 1
        %p162 = scmp.lt.s32.totalorder %s30, 1
        %s163 = scalar_select %p162, %s30, 1
        %s164 = smul.addr %s163, 8
        %s165 = scalar_lea.vmem %s2, %s164
        %p166 = pneg %p51
        %p167 = pneg %p48
        %p168 = pneg %p77
        %p169 = pneg %p74
        %p170 = scmp.lt.s32.totalorder %s30, 1
        %s171 = scalar_select %p170, %s30, 1
        %s172 = scalar_lea.vmem %s3, %s171
        %p173 = pneg %p103
        %p174 = pneg %p100
        %p175 = scmp.lt.s32.totalorder %s30, 1
        %s176 = scalar_select %p175, %s30, 1
        %s177 = scalar_lea.vmem %s4, %s176
        %p178 = pneg %p129
        %p179 = pneg %p126
        %s180 = sand.u32 %s116, 1
        %s181 = scalar_lea.sflag [#allocation6], %s180
        %s182 = sand.u32 %s116, 1
        %s183 = smul.addr %s182, 4
        %s184 = scalar_lea.vmem [#allocation5], %s183
        %p185 = scmp.lt.s32.totalorder %s30, 1
        %s186 = scalar_select %p185, %s30, 1
        %s187 = smul.addr %s186, 8
        %s188 = scalar_lea.vmem %s2, %s187
        %p189 = scmp.lt.s32.totalorder %s30, 1
        %s190 = scalar_select %p189, %s30, 1
        %s191 = scalar_lea.vmem %s3, %s190
        %p192 = scmp.lt.s32.totalorder %s30, 1
        %s193 = scalar_select %p192, %s30, 1
        %s194 = scalar_lea.vmem %s4, %s193
        %s195 = smul.u32 %s30, 128
        %s196 = sld [smem:[#allocation3 + %s195]]
        %s197 = scalar_lea.vmem %s188, %s196
        %v198 = vld [vmem:[%s197] sm:$0x1]
        %s199 = sld [smem:[#allocation4 + %s195]]
        %v200 = vstv %s199
        %v201 = vmul.f32 %v198, %v200
        %vm202 = vcmask 253952
        %203 = vst.msk [vmem:[%s184] sm:$0x1] %vm202, %v201
        %s204 = sadd.s32 %s195, 1
        %s205 = sld [smem:[#allocation3 + %s204]]
        %s206 = scalar_lea.vmem %s188, %s205
        %v207 = vld [vmem:[%s206] sm:$0x1]
        %s208 = sld [smem:[#allocation4 + %s204]]
        %v209 = vstv %s208
        %v210 = vmul.f32 %v207, %v209
        %211 = vst.msk [vmem:[%s184 + $0x1] sm:$0x1] %vm202, %v210
        %s212 = sadd.s32 %s195, 2
        %s213 = sld [smem:[#allocation3 + %s212]]
        %s214 = scalar_lea.vmem %s188, %s213
        %v215 = vld [vmem:[%s214] sm:$0x1]
        %s216 = sld [smem:[#allocation4 + %s212]]
        %v217 = vstv %s216
        %v218 = vmul.f32 %v215, %v217
        %219 = vst.msk [vmem:[%s184 + $0x2] sm:$0x1] %vm202, %v218
        %s220 = sadd.s32 %s195, 3
        %s221 = sld [smem:[#allocation3 + %s220]]
        %s222 = scalar_lea.vmem %s188, %s221
        %v223 = vld [vmem:[%s222] sm:$0x1]
        %s224 = sld [smem:[#allocation4 + %s220]]
        %v225 = vstv %s224
        %v226 = vmul.f32 %v223, %v225
        %227 = vst.msk [vmem:[%s184 + $0x3] sm:$0x1] %vm202, %v226
        %v228 = vld [vmem:[%s184] sm:$0xf]
        %vm229 = vcmask 257024
        %v230 = vsel %vm229, %v228, -inf
        %v231 = vrot.slane %v230, 4
        %v232 = vmax.f32 %v230, %v231
        %v233 = vrot.slane %v232, 2
        %v234 = vmax.f32 %v232, %v233
        %v235 = vrot.slane %v234, 1
        %v236 = vmax.f32 %v234, %v235
        %237 = vst.msk [vmem:[%s191] sm:$0x1] %vm202, %v236
        %v238 = vsel %vm229, %v228, 0.0
        %v239 = vrot.slane %v238, 4
        %v240 = vadd.f32 %v238, %v239
        %v241 = vrot.slane %v240, 2
        %v242 = vadd.f32 %v240, %v241
        %v243 = vrot.slane %v242, 1
        %v244 = vadd.f32 %v242, %v243
        %v245 = vmul.f32 %v244, 0.25
        %246 = vst.msk [vmem:[%s194] sm:$0x1] %vm202, %v245
        %p247 = scmp.lt.s32.totalorder %s30, 1
        %s248 = scalar_select %p247, %s30, 1
        %s249 = scalar_lea.vmem %s3, %s248
        %p250 = scmp.lt.s32.totalorder %s30, 1
        %s251 = scalar_select %p250, %s30, 1
        %s252 = scalar_lea.vmem %s4, %s251
        %s253 = sand.u32 %s116, 1
        %s254 = scalar_lea.sflag [#allocation6], %s253
        %s255 = sand.u32 %s116, 1
        %s256 = smul.addr %s255, 4
        %s257 = scalar_lea.vmem [#allocation5], %s256
        // Predicated region
        $region25: #{gcn_pool_block_forward.7} parent=23 // pred_check
          %p258 = pneg %p74
        $region26: #{gcn_pool_block_forward.7} parent=23 // pred_check_branch
          %260 = sbr.rel (%p258) target = $region28
        $region27: #{gcn_pool_block_forward.7} parent=23 // pred_region
          _
        $region28: #{gcn_pool_block_forward.7} parent=23 // pred_fallthru
          _
        // Predicated region
        $region29: #{gcn_pool_block_forward.7} parent=23 // pred_check
          %p261 = pneg %p100
        $region30: #{gcn_pool_block_forward.7} parent=23 // pred_check_branch
          %263 = sbr.rel (%p261) target = $region32
        $region31: #{gcn_pool_block_forward.7} parent=23 // pred_region
          _
        $region32: #{gcn_pool_block_forward.7} parent=23 // pred_fallthru
          _
        // Predicated region
        $region33: #{gcn_pool_block_forward.7} parent=23 // pred_check
          %p264 = pneg %p126
        $region34: #{gcn_pool_block_forward.7} parent=23 // pred_check_branch
          %266 = sbr.rel (%p264) target = $region36
        $region35: #{gcn_pool_block_forward.7} parent=23 // pred_region
          %s268 = ssub.s32 64, 64
          %269 = vsyncadd %s254, %s268
          %s270 = smul.addr %s30, 64
          %s271 = scalar_lea.hbm %s5, %s270
          %s273 = sshll.u32 %s257, 4
          %s274 = int_to_ptr.vmem [resolvable:$true] %s273
          %276 = dma.vmem_to_hbm [thread:$0]  %s274, 64, %s271, %s254
        $region36: #{gcn_pool_block_forward.7} parent=23 // pred_fallthru
          _
      $region24: #{gcn_pool_block_forward.7} parent=5 // pred_fallthru
        _
      %p277 = scmp.le.s32.totalorder 2, %s25
      // Predicated region
      $region37: #{gcn_pool_block_forward.7} parent=5 // pred_check
        %p278 = pneg %p277
      $region38: #{gcn_pool_block_forward.7} parent=5 // pred_check_branch
        %280 = sbr.rel (%p278) target = $region40
      $region39: #{gcn_pool_block_forward.7} parent=5 // pred_region
        %s281 = ssub.s32 %s25, 2
        // Predicated region
        $region41: #{gcn_pool_block_forward.7} parent=39 // pred_check
          %p282 = pneg %p80
        $region42: #{gcn_pool_block_forward.7} parent=39 // pred_check_branch
          %284 = sbr.rel (%p282) target = $region44
        $region43: #{gcn_pool_block_forward.7} parent=39 // pred_region
          %p285 = scmp.lt.s32.totalorder %s31, 1
          %s286 = scalar_select %p285, %s31, 1
          %s287 = scalar_lea.vmem %s3, %s286
        $region44: #{gcn_pool_block_forward.7} parent=39 // pred_fallthru
          _
        // Predicated region
        $region45: #{gcn_pool_block_forward.7} parent=39 // pred_check
          %p288 = pneg %p106
        $region46: #{gcn_pool_block_forward.7} parent=39 // pred_check_branch
          %290 = sbr.rel (%p288) target = $region48
        $region47: #{gcn_pool_block_forward.7} parent=39 // pred_region
          %p291 = scmp.lt.s32.totalorder %s31, 1
          %s292 = scalar_select %p291, %s31, 1
          %s293 = scalar_lea.vmem %s4, %s292
        $region48: #{gcn_pool_block_forward.7} parent=39 // pred_fallthru
          _
        // Predicated region
        $region49: #{gcn_pool_block_forward.7} parent=39 // pred_check
          %p294 = pneg %p132
        $region50: #{gcn_pool_block_forward.7} parent=39 // pred_check_branch
          %296 = sbr.rel (%p294) target = $region52
        $region51: #{gcn_pool_block_forward.7} parent=39 // pred_region
          %s297 = sand.u32 %s117, 1
          %s298 = scalar_lea.sflag [#allocation6], %s297
          %s299 = sand.u32 %s117, 1
          %s300 = smul.addr %s299, 4
          %s301 = scalar_lea.vmem [#allocation5], %s300
          %302 = dma.done %s298, 64
        $region52: #{gcn_pool_block_forward.7} parent=39 // pred_fallthru
          _
      $region40: #{gcn_pool_block_forward.7} parent=5 // pred_fallthru
        _
    $region6: #{gcn_pool_block_forward.7} parent=1 // loop_footer
      %s29 = sadd.s32 1, %s25
    $region7: #{gcn_pool_block_forward.7} parent=1 // loop_footer_branch
      %24 = sbr.rel target = $region3
    $region8: #{gcn_pool_block_forward.7} parent=1 // loop_exit
      _
    %303 = vsyncpa [#allocation6], 1
    %s304 = scalar_lea.sflag [#allocation6], 1
    %305 = vsyncpa %s304, 1

</llo_original>
